<compile_context>
chip_gen: v7x
topology: tpu7x:2x2x1
jax: 0.10.0
libtpu: 0.0.40
codegen_flags: <defaults>
</compile_context>

<pallas_src>
import math

import jax
import jax.numpy as jnp
from jax.experimental import pallas as pl
from jax.experimental.pallas import tpu as pltpu


# ---------------------------------------------------------------------------
# Pallas kernel: fused gather + 4-layer MLP, feature-major orientation.
#   Every activation is (features, TM): lane axis = clause rows (lane-dense
#   everywhere), sublane axis = features, so all matmuls are standard
#   (M,K)x(K,N) contractions and the output is a lane-dense (1, TM) row.
# ---------------------------------------------------------------------------
def _fused_decoder_kernel(bid_ref,                 # SMEM (num_tiles,) branch id (used only by index_maps)
                          idx_ref,                 # (3, TM)  int32  clause node ids (slot-major)
                          lT_ref,                  # (H, N)   bf16   local_embedding^T (VMEM-resident)
                          gT_ref,                  # (H, 1)   bf16   global_embedding^T (VMEM-resident)
                          w1t_ref, b1t_ref,        # (2H, 4H) bf16 / (2H, 1) f32  branch W1^T, b1^T
                          w2t_ref, b2t_ref,        # (H, 2H)  bf16 / (H, 1)  f32  branch W2^T, b2^T
                          wc1t_ref, bc1t_ref,      # (H, H)   bf16 / (H, 1)  f32  common Wc1^T, bc1^T
                          wc2_ref,                 # (H, 1)   f32                 common Wc2
                          o_ref):                  # (1, TM)  f32  lane-dense scores (bc2 added in wrapper)
    del bid_ref  # consumed only by the weight index_maps
    H, N = lT_ref.shape
    TM = idx_ref.shape[1]

    idx = idx_ref[...]                                                    # (3, TM) int32
    lT = lT_ref[...]                                                      # (H, N)  bf16
    node_iota = jax.lax.broadcasted_iota(jnp.int32, (N, TM), 0)

    # ---- fused gather: one-hot MXU gathers against the VMEM-resident table ----
    # Each one-hot column has exactly one 1, so the picked bf16 embedding values
    # are reproduced exactly (f32 accumulate, lossless re-cast to bf16).
    # TODO(synk): for very large node tables (num_nodes >> hidden_dim) replace
    # this with a manual DMA row-gather; the one-hot compare/matmul is
    # O(num_nodes * TM) per slot.
    slots = []
    for s in range(3):                                                    # node slots 0..2
        onehot = jnp.where(node_iota == idx[s:s + 1, :],
                           1.0, 0.0).astype(jnp.bfloat16)                 # (N, TM)
        emb = jnp.dot(lT, onehot, preferred_element_type=jnp.float32)     # (H, TM)
        slots.append(emb.astype(jnp.bfloat16))
    slots.append(jnp.broadcast_to(gT_ref[...], (H, TM)))                  # global slot
    xT = jnp.concatenate(slots, axis=0)                                   # (4H, TM) bf16

    # ---- branch op layer: Linear(4H->2H) -> ReLU -> Linear(2H->H) ----
    h = jnp.dot(w1t_ref[...], xT, preferred_element_type=jnp.float32) + b1t_ref[...]
    h = jnp.maximum(h, 0.0)                                               # (2H, TM)
    h = jnp.dot(w2t_ref[...], h.astype(jnp.bfloat16),
                preferred_element_type=jnp.float32) + b2t_ref[...]        # (H, TM)

    # ---- shared common layer: ReLU -> Linear(H->H) -> ReLU -> Linear(H->1) ----
    h = jnp.maximum(h, 0.0)
    h = jnp.dot(wc1t_ref[...], h.astype(jnp.bfloat16),
                preferred_element_type=jnp.float32) + bc1t_ref[...]       # (H, TM)
    h = jnp.maximum(h, 0.0)
    # final H->1 layer: VPU multiply + sublane reduction -> lane-dense (1, TM)
    o_ref[...] = jnp.sum(h * wc2_ref[...], axis=0, keepdims=True)


# ---------------------------------------------------------------------------
# Weight packing into the kernel layout (done once, outside the hot path)
# ---------------------------------------------------------------------------
def pack_params(params, hidden_dim):
    H = hidden_dim
    bw1, bb1, bw2, bb2 = params["binary_op"]    # 3H -> 2H, 2H -> H   (unary clauses)
    tw1, tb1, tw2, tb2 = params["ternary_op"]   # 4H -> 2H, 2H -> H   (binary clauses)
    cw1, cb1, cw2, cb2 = params["common"]       # H -> H, H -> 1
    # In-kernel input layout is [node0, node1, node2, global] for BOTH branches.
    # The unary branch has no node2: insert H zero weight rows so the dummy
    # gathered embedding contributes exactly nothing.
    bw1p = jnp.concatenate(
        [bw1[:2 * H], jnp.zeros((H, 2 * H), bw1.dtype), bw1[2 * H:]], axis=0)  # (4H, 2H)
    return {
        "w1t": jnp.stack([bw1p.T, tw1.T]).astype(jnp.bfloat16),   # (2, 2H, 4H)
        "b1t": jnp.stack([bb1.T, tb1.T]).astype(jnp.float32),     # (2, 2H, 1)
        "w2t": jnp.stack([bw2.T, tw2.T]).astype(jnp.bfloat16),    # (2, H, 2H)
        "b2t": jnp.stack([bb2.T, tb2.T]).astype(jnp.float32),     # (2, H, 1)
        "wc1t": cw1.T.astype(jnp.bfloat16),                       # (H, H)
        "bc1t": cb1.reshape(H, 1).astype(jnp.float32),            # (H, 1)
        "wc2": cw2.reshape(H, 1).astype(jnp.float32),             # (H, 1)
        "bc2": cb2.reshape(()).astype(jnp.float32),               # scalar (wrapper epilogue)
    }


# ---------------------------------------------------------------------------
# ClauseDecoder forward: index packing in plain JAX, everything else in-kernel
# ---------------------------------------------------------------------------
def clause_decoder_forward(local_embedding, global_embedding,
                           unary_clauses_idx, binary_clauses_idx, packed):
    """
    local_embedding : (num_nodes, H)
    global_embedding: (1, H)
    unary_clauses_idx : (num_unary, 2) int32   -> binary_op_layer path (3H in)
    binary_clauses_idx: (num_binary, 3) int32  -> ternary_op_layer path (4H in)
    returns (1, num_unary + num_binary)
    """
    H = global_embedding.shape[-1]
    N = local_embedding.shape[0]
    nu = unary_clauses_idx.shape[0]
    nb = binary_clauses_idx.shape[0]

    if nu == 0 and nb == 0:                       # static (shape-derived) guard
        return jnp.zeros((1, 0), jnp.float32)

    # Adaptive row tile: TM is the lane axis of every kernel tensor, so keep it
    # a multiple of 128.  Smaller tile -> less pad waste for small clause
    # counts; with both branches non-empty there are always >= 2 grid tiles so
    # v7x's two TensorCores both get work.
    tm = 256 if max(nu, nb) <= 4096 else 512

    # ---- pack clause node indices: (n, 3) int32, slot-2 dummy (=0) for unary ----
    def _pad_rows(a, rows):
        return jnp.pad(a, ((0, rows - a.shape[0]), (0, 0)))

    segs, bids = [], []
    nu_pad = -(-nu // tm) * tm if nu > 0 else 0
    nb_pad = -(-nb // tm) * tm if nb > 0 else 0
    if nu > 0:
        u_idx = jnp.pad(unary_clauses_idx.astype(jnp.int32), ((0, 0), (0, 1)))
        segs.append(_pad_rows(u_idx, nu_pad))
        bids.append(jnp.zeros((nu_pad // tm,), jnp.int32))
    if nb > 0:
        segs.append(_pad_rows(binary_clauses_idx.astype(jnp.int32), nb_pad))
        bids.append(jnp.ones((nb_pad // tm,), jnp.int32))
    idx_t = jnp.concatenate(segs, axis=0).T                # (3, n_total) int32
    branch_id = jnp.concatenate(bids)                      # (num_tiles,)
    n_total = nu_pad + nb_pad
    num_tiles = n_total // tm

    # embeddings: one bf16 cast + transpose of the small tables (feature-major)
    lT = local_embedding.astype(jnp.bfloat16).T            # (H, N)
    gT = global_embedding.astype(jnp.bfloat16).reshape(H, 1)

    grid_spec = pltpu.PrefetchScalarGridSpec(
        num_scalar_prefetch=1,
        grid=(num_tiles,),
        in_specs=[
            # per-tile clause node ids (only ~12 bytes/row of HBM traffic)
            pl.BlockSpec((3, tm), lambda i, bid: (0, i)),
            # embedding tables: constant index_map -> fetched once, VMEM-resident
            pl.BlockSpec((H, N), lambda i, bid: (0, 0)),
            pl.BlockSpec((H, 1), lambda i, bid: (0, 0)),
            # branch weights: stacked [unary, binary], block picked by the
            # scalar-prefetched branch id; the block index changes at most once
            # across the grid so they are re-DMA'd at most once.
            # TODO(synk): for H >= 512 on v7x, single-buffer these weights
            # (pipeline_mode=pl.Buffered(1)) to halve their VMEM footprint.
            pl.BlockSpec((None, 2 * H, 4 * H), lambda i, bid: (bid[i], 0, 0)),
            pl.BlockSpec((None, 2 * H, 1), lambda i, bid: (bid[i], 0, 0)),
            pl.BlockSpec((None, H, 2 * H), lambda i, bid: (bid[i], 0, 0)),
            pl.BlockSpec((None, H, 1), lambda i, bid: (bid[i], 0, 0)),
            # common-layer weights: constant index_map -> VMEM-resident
            pl.BlockSpec((H, H), lambda i, bid: (0, 0)),
            pl.BlockSpec((H, 1), lambda i, bid: (0, 0)),
            pl.BlockSpec((H, 1), lambda i, bid: (0, 0)),
        ],
        out_specs=pl.BlockSpec((1, tm), lambda i, bid: (0, i)),
    )

    # advisory cost hint so XLA schedules the surrounding glue around the kernel
    flops = 2 * n_total * (3 * N * H + 4 * H * 2 * H + 2 * H * H + H * H + H)
    bytes_accessed = (n_total * (3 * 4 + 4)                 # idx in + scores out
                      + (N + 1) * H * 2                     # embedding tables (bf16)
                      + 2 * (8 * H * H + 2 * H * H) * 2     # branch weights (both)
                      + H * H * 2 + 10 * H * 4)             # common weights + biases
    cost = pl.CostEstimate(flops=flops, transcendentals=0,
                           bytes_accessed=bytes_accessed)

    out = pl.pallas_call(
        _fused_decoder_kernel,
        out_shape=jax.ShapeDtypeStruct((1, n_total), jnp.float32),
        grid_spec=grid_spec,
        compiler_params=pltpu.CompilerParams(
            dimension_semantics=("parallel",),      # shard row tiles over v7x's 2 TCs
            vmem_limit_bytes=64 * 1024 * 1024,      # explicit budget (<= v7x physical VMEM)
        ),
        cost_estimate=cost,
    )(branch_id, idx_t, lT, gT,
      packed["w1t"], packed["b1t"], packed["w2t"], packed["b2t"],
      packed["wc1t"], packed["bc1t"], packed["wc2"])

    # drop pad rows, add the scalar output bias in the epilogue
    if nu > 0 and nb > 0:
        scores = jnp.concatenate([out[0, :nu], out[0, nu_pad:nu_pad + nb]])
    elif nu > 0:
        scores = out[0, :nu]
    else:
        scores = out[0, :nb]
    scores = scores + packed["bc2"]
    return scores.reshape(1, nu + nb)


# ---------------------------------------------------------------------------
# Deterministic parameter init (PyTorch-style uniform(-1/sqrt(fan_in), ...))
# ---------------------------------------------------------------------------
def _linear_params(key, fan_in, fan_out):
    k_w, k_b = jax.random.split(key)
    bound = 1.0 / math.sqrt(fan_in)
    w = jax.random.uniform(k_w, (fan_in, fan_out), jnp.float32, -bound, bound)
    b = jax.random.uniform(k_b, (1, fan_out), jnp.float32, -bound, bound)
    return w, b


def init_params(key, hidden_dim):
    keys = jax.random.split(key, 6)
    H = hidden_dim
    bw1, bb1 = _linear_params(keys[0], 3 * H, 2 * H)
    bw2, bb2 = _linear_params(keys[1], 2 * H, H)
    tw1, tb1 = _linear_params(keys[2], 4 * H, 2 * H)
    tw2, tb2 = _linear_params(keys[3], 2 * H, H)
    cw1, cb1 = _linear_params(keys[4], H, H)
    cw2, cb2 = _linear_params(keys[5], H, 1)
    return {
        "binary_op": (bw1, bb1, bw2, bb2),
        "ternary_op": (tw1, tb1, tw2, tb2),
        "common": (cw1, cb1, cw2, cb2),
    }


# ---------------------------------------------------------------------------
# Pure-JAX fp32 reference (module semantics) for the correctness check
# ---------------------------------------------------------------------------
def _ref_branch(rep, branch_params, common_params):
    w1, b1, w2, b2 = branch_params
    cw1, cb1, cw2, cb2 = common_params
    h = jnp.maximum(rep @ w1 + b1, 0.0)
    h = h @ w2 + b2
    h = jnp.maximum(h, 0.0)
    h = jnp.maximum(h @ cw1 + cb1, 0.0)
    return (h @ cw2 + cb2)[:, 0]


def _reference_forward(local_embedding, global_embedding,
                       unary_idx, binary_idx, params):
    H = global_embedding.shape[-1]
    nu, nb = unary_idx.shape[0], binary_idx.shape[0]
    g_u = jnp.broadcast_to(global_embedding[None, :, :], (nu, 1, H))
    unary_rep = jnp.concatenate(
        [local_embedding[unary_idx, :], g_u], axis=1).reshape(nu, 3 * H)
    g_b = jnp.broadcast_to(global_embedding[None, :, :], (nb, 1, H))
    binary_rep = jnp.concatenate(
        [local_embedding[binary_idx, :], g_b], axis=1).reshape(nb, 4 * H)
    x_u = _ref_branch(unary_rep, params["binary_op"], params["common"])
    x_b = _ref_branch(binary_rep, params["ternary_op"], params["common"])
    x = jnp.concatenate([x_u, x_b])
    return x.reshape(1, x.shape[-1])


# ---------------------------------------------------------------------------
if __name__ == "__main__":
    H = 32              # hidden_dim
    NUM_NODES = 16
    NUM_UNARY = 6       # unary clauses reference 2 nodes each  -> 3H input
    NUM_BINARY = 5      # binary clauses reference 3 nodes each -> 4H input

    root = jax.random.PRNGKey(0)
    k_params, k_local, k_global, k_uidx, k_bidx = jax.random.split(root, 5)

    params = init_params(k_params, H)
    packed = pack_params(params, H)

    local_embedding = jax.random.normal(k_local, (NUM_NODES, H), jnp.float32)
    global_embedding = jax.random.normal(k_global, (1, H), jnp.float32)
    unary_clauses_idx = jax.random.randint(
        k_uidx, (NUM_UNARY, 2), 0, NUM_NODES, jnp.int32)
    binary_clauses_idx = jax.random.randint(
        k_bidx, (NUM_BINARY, 3), 0, NUM_NODES, jnp.int32)

    fwd = jax.jit(clause_decoder_forward)
    out = fwd(local_embedding, global_embedding,
              unary_clauses_idx, binary_clauses_idx, packed)
    out = jax.block_until_ready(out)

    ref = _reference_forward(local_embedding, global_embedding,
                             unary_clauses_idx, binary_clauses_idx, params)
    ref = jax.block_until_ready(ref)

    assert out.shape == (1, NUM_UNARY + NUM_BINARY), out.shape
    max_err = float(jnp.max(jnp.abs(out - ref)))
    # bf16 matmul operands with fp32 accumulation -> loosened tolerance vs fp32 ref
    assert jnp.allclose(out, ref, atol=2e-2, rtol=2e-2), (max_err, out, ref)

    print("KERNEL_OK")
</pallas_src>

<mosaic_0001>
module attributes {stable_mosaic.version = 11 : i64} {
  func.func @_fused_decoder_kernel(%arg0: i32, %arg1: memref<2xi32, #tpu.memory_space<smem>>, %arg2: memref<3x256xi32, #tpu.memory_space<vmem>>, %arg3: memref<32x16xbf16, #tpu.memory_space<vmem>>, %arg4: memref<32x1xbf16, #tpu.memory_space<vmem>>, %arg5: memref<1x64x128xbf16, #tpu.memory_space<vmem>>, %arg6: memref<1x64x1xf32, #tpu.memory_space<vmem>>, %arg7: memref<1x32x64xbf16, #tpu.memory_space<vmem>>, %arg8: memref<1x32x1xf32, #tpu.memory_space<vmem>>, %arg9: memref<32x32xbf16, #tpu.memory_space<vmem>>, %arg10: memref<32x1xf32, #tpu.memory_space<vmem>>, %arg11: memref<32x1xf32, #tpu.memory_space<vmem>>, %arg12: memref<1x256xf32, #tpu.memory_space<vmem>>) attributes {dimension_semantics = [#tpu.dimension_semantics<parallel>], iteration_bounds = array<i64: 2>, scalar_prefetch = 1 : i64, scratch_operands = 0 : i64, tpu.core_type = #tpu.core_type<tc>, window_params = [{transform_indices = @transform_0, window_bounds = array<i64: 3, 256>}, {pipeline_mode = #tpu.pipeline_mode<synchronous>, transform_indices = @transform_1, window_bounds = array<i64: 32, 16>}, {pipeline_mode = #tpu.pipeline_mode<synchronous>, transform_indices = @transform_2, window_bounds = array<i64: 32, 1>}, {transform_indices = @transform_3, window_bounds = array<i64: 1, 64, 128>}, {transform_indices = @transform_4, window_bounds = array<i64: 1, 64, 1>}, {transform_indices = @transform_5, window_bounds = array<i64: 1, 32, 64>}, {transform_indices = @transform_6, window_bounds = array<i64: 1, 32, 1>}, {pipeline_mode = #tpu.pipeline_mode<synchronous>, transform_indices = @transform_7, window_bounds = array<i64: 32, 32>}, {pipeline_mode = #tpu.pipeline_mode<synchronous>, transform_indices = @transform_8, window_bounds = array<i64: 32, 1>}, {pipeline_mode = #tpu.pipeline_mode<synchronous>, transform_indices = @transform_9, window_bounds = array<i64: 32, 1>}, {transform_indices = @transform_10, window_bounds = array<i64: 1, 256>}]} {
    %c0 = arith.constant 0 : index
    %c0_0 = arith.constant 0 : index
    %0 = vector.load %arg2[%c0, %c0_0] : memref<3x256xi32, #tpu.memory_space<vmem>>, vector<3x256xi32>
    %c0_1 = arith.constant 0 : index
    %c0_2 = arith.constant 0 : index
    %1 = vector.load %arg3[%c0_1, %c0_2] : memref<32x16xbf16, #tpu.memory_space<vmem>>, vector<32x16xbf16>
    %2 = tpu.iota {dimensions = array<i32: 0>} : vector<16x256xi32>
    %3 = vector.extract_strided_slice %0 {offsets = [0, 0], sizes = [1, 256], strides = [1, 1]} : vector<3x256xi32> to vector<1x256xi32>
    %4 = vector.broadcast %3 : vector<1x256xi32> to vector<16x256xi32>
    %5 = arith.cmpi eq, %2, %4 : vector<16x256xi32>
    %cst = arith.constant 1.000000e+00 : f32
    %cst_3 = arith.constant 0.000000e+00 : f32
    %6 = vector.broadcast %cst : f32 to vector<16x256xf32>
    %7 = vector.broadcast %cst_3 : f32 to vector<16x256xf32>
    %8 = arith.select %5, %6, %7 : vector<16x256xi1>, vector<16x256xf32>
    %9 = arith.truncf %8 : vector<16x256xf32> to vector<16x256xbf16>
    %cst_4 = arith.constant dense<0.000000e+00> : vector<32x256xf32>
    %10 = tpu.matmul %1, %9, %cst_4 {dimension_numbers = #tpu.dot_dimension_numbers<[1], [0], [0], [1], [0, 0, 1, 1], [], []>} : vector<32x16xbf16>, vector<16x256xbf16>, vector<32x256xf32> -> vector<32x256xf32>
    %11 = arith.truncf %10 : vector<32x256xf32> to vector<32x256xbf16>
    %12 = vector.extract_strided_slice %0 {offsets = [1, 0], sizes = [1, 256], strides = [1, 1]} : vector<3x256xi32> to vector<1x256xi32>
    %13 = vector.broadcast %12 : vector<1x256xi32> to vector<16x256xi32>
    %14 = arith.cmpi eq, %2, %13 : vector<16x256xi32>
    %cst_5 = arith.constant 1.000000e+00 : f32
    %cst_6 = arith.constant 0.000000e+00 : f32
    %15 = vector.broadcast %cst_5 : f32 to vector<16x256xf32>
    %16 = vector.broadcast %cst_6 : f32 to vector<16x256xf32>
    %17 = arith.select %14, %15, %16 : vector<16x256xi1>, vector<16x256xf32>
    %18 = arith.truncf %17 : vector<16x256xf32> to vector<16x256xbf16>
    %cst_7 = arith.constant dense<0.000000e+00> : vector<32x256xf32>
    %19 = tpu.matmul %1, %18, %cst_7 {dimension_numbers = #tpu.dot_dimension_numbers<[1], [0], [0], [1], [0, 0, 1, 1], [], []>} : vector<32x16xbf16>, vector<16x256xbf16>, vector<32x256xf32> -> vector<32x256xf32>
    %20 = arith.truncf %19 : vector<32x256xf32> to vector<32x256xbf16>
    %21 = vector.extract_strided_slice %0 {offsets = [2, 0], sizes = [1, 256], strides = [1, 1]} : vector<3x256xi32> to vector<1x256xi32>
    %22 = vector.broadcast %21 : vector<1x256xi32> to vector<16x256xi32>
    %23 = arith.cmpi eq, %2, %22 : vector<16x256xi32>
    %cst_8 = arith.constant 1.000000e+00 : f32
    %cst_9 = arith.constant 0.000000e+00 : f32
    %24 = vector.broadcast %cst_8 : f32 to vector<16x256xf32>
    %25 = vector.broadcast %cst_9 : f32 to vector<16x256xf32>
    %26 = arith.select %23, %24, %25 : vector<16x256xi1>, vector<16x256xf32>
    %27 = arith.truncf %26 : vector<16x256xf32> to vector<16x256xbf16>
    %cst_10 = arith.constant dense<0.000000e+00> : vector<32x256xf32>
    %28 = tpu.matmul %1, %27, %cst_10 {dimension_numbers = #tpu.dot_dimension_numbers<[1], [0], [0], [1], [0, 0, 1, 1], [], []>} : vector<32x16xbf16>, vector<16x256xbf16>, vector<32x256xf32> -> vector<32x256xf32>
    %29 = arith.truncf %28 : vector<32x256xf32> to vector<32x256xbf16>
    %c0_11 = arith.constant 0 : index
    %c0_12 = arith.constant 0 : index
    %30 = vector.load %arg4[%c0_11, %c0_12] : memref<32x1xbf16, #tpu.memory_space<vmem>>, vector<32x1xbf16>
    %31 = vector.shape_cast %30 : vector<32x1xbf16> to vector<32x1xbf16>
    %32 = vector.broadcast %31 : vector<32x1xbf16> to vector<32x256xbf16>
    %33 = tpu.concatenate %11, %20, %29, %32 in 0 : vector<32x256xbf16>, vector<32x256xbf16>, vector<32x256xbf16>, vector<32x256xbf16> -> vector<128x256xbf16>
    %c0_13 = arith.constant 0 : index
    %c0_14 = arith.constant 0 : index
    %c0_15 = arith.constant 0 : index
    %34 = vector.load %arg5[%c0_13, %c0_14, %c0_15] : memref<1x64x128xbf16, #tpu.memory_space<vmem>>, vector<1x64x128xbf16>
    %35 = vector.shape_cast %34 : vector<1x64x128xbf16> to vector<64x128xbf16>
    %cst_16 = arith.constant dense<0.000000e+00> : vector<64x256xf32>
    %36 = tpu.matmul %35, %33, %cst_16 {dimension_numbers = #tpu.dot_dimension_numbers<[1], [0], [0], [1], [0, 0, 1, 1], [], []>} : vector<64x128xbf16>, vector<128x256xbf16>, vector<64x256xf32> -> vector<64x256xf32>
    %c0_17 = arith.constant 0 : index
    %c0_18 = arith.constant 0 : index
    %c0_19 = arith.constant 0 : index
    %37 = vector.load %arg6[%c0_17, %c0_18, %c0_19] : memref<1x64x1xf32, #tpu.memory_space<vmem>>, vector<1x64x1xf32>
    %38 = vector.shape_cast %37 : vector<1x64x1xf32> to vector<64x1xf32>
    %39 = vector.broadcast %38 : vector<64x1xf32> to vector<64x256xf32>
    %40 = arith.addf %36, %39 : vector<64x256xf32>
    %cst_20 = arith.constant 0.000000e+00 : f32
    %41 = vector.broadcast %cst_20 : f32 to vector<64x256xf32>
    %42 = arith.maximumf %40, %41 : vector<64x256xf32>
    %c0_21 = arith.constant 0 : index
    %c0_22 = arith.constant 0 : index
    %c0_23 = arith.constant 0 : index
    %43 = vector.load %arg7[%c0_21, %c0_22, %c0_23] : memref<1x32x64xbf16, #tpu.memory_space<vmem>>, vector<1x32x64xbf16>
    %44 = vector.shape_cast %43 : vector<1x32x64xbf16> to vector<32x64xbf16>
    %45 = arith.truncf %42 : vector<64x256xf32> to vector<64x256xbf16>
    %cst_24 = arith.constant dense<0.000000e+00> : vector<32x256xf32>
    %46 = tpu.matmul %44, %45, %cst_24 {dimension_numbers = #tpu.dot_dimension_numbers<[1], [0], [0], [1], [0, 0, 1, 1], [], []>} : vector<32x64xbf16>, vector<64x256xbf16>, vector<32x256xf32> -> vector<32x256xf32>
    %c0_25 = arith.constant 0 : index
    %c0_26 = arith.constant 0 : index
    %c0_27 = arith.constant 0 : index
    %47 = vector.load %arg8[%c0_25, %c0_26, %c0_27] : memref<1x32x1xf32, #tpu.memory_space<vmem>>, vector<1x32x1xf32>
    %48 = vector.shape_cast %47 : vector<1x32x1xf32> to vector<32x1xf32>
    %49 = vector.broadcast %48 : vector<32x1xf32> to vector<32x256xf32>
    %50 = arith.addf %46, %49 : vector<32x256xf32>
    %cst_28 = arith.constant 0.000000e+00 : f32
    %51 = vector.broadcast %cst_28 : f32 to vector<32x256xf32>
    %52 = arith.maximumf %50, %51 : vector<32x256xf32>
    %c0_29 = arith.constant 0 : index
    %c0_30 = arith.constant 0 : index
    %53 = vector.load %arg9[%c0_29, %c0_30] : memref<32x32xbf16, #tpu.memory_space<vmem>>, vector<32x32xbf16>
    %54 = arith.truncf %52 : vector<32x256xf32> to vector<32x256xbf16>
    %cst_31 = arith.constant dense<0.000000e+00> : vector<32x256xf32>
    %55 = tpu.matmul %53, %54, %cst_31 {dimension_numbers = #tpu.dot_dimension_numbers<[1], [0], [0], [1], [0, 0, 1, 1], [], []>} : vector<32x32xbf16>, vector<32x256xbf16>, vector<32x256xf32> -> vector<32x256xf32>
    %c0_32 = arith.constant 0 : index
    %c0_33 = arith.constant 0 : index
    %56 = vector.load %arg10[%c0_32, %c0_33] : memref<32x1xf32, #tpu.memory_space<vmem>>, vector<32x1xf32>
    %57 = vector.broadcast %56 : vector<32x1xf32> to vector<32x256xf32>
    %58 = arith.addf %55, %57 : vector<32x256xf32>
    %cst_34 = arith.constant 0.000000e+00 : f32
    %59 = vector.broadcast %cst_34 : f32 to vector<32x256xf32>
    %60 = arith.maximumf %58, %59 : vector<32x256xf32>
    %c0_35 = arith.constant 0 : index
    %c0_36 = arith.constant 0 : index
    %61 = vector.load %arg11[%c0_35, %c0_36] : memref<32x1xf32, #tpu.memory_space<vmem>>, vector<32x1xf32>
    %62 = vector.broadcast %61 : vector<32x1xf32> to vector<32x256xf32>
    %63 = arith.mulf %60, %62 : vector<32x256xf32>
    %cst_37 = arith.constant dense<0.000000e+00> : vector<256xf32>
    %64 = vector.multi_reduction <add>, %63, %cst_37 [0] : vector<32x256xf32> to vector<256xf32>
    %65 = vector.shape_cast %64 : vector<256xf32> to vector<1x256xf32>
    %c0_38 = arith.constant 0 : index
    %c0_39 = arith.constant 0 : index
    %66 = vector.load %arg12[%c0_38, %c0_39] : memref<1x256xf32, #tpu.memory_space<vmem>>, vector<1x256xf32>
    tpu.vector_store %arg12[%c0_38, %c0_39], %65 {strides = array<i32>} : memref<1x256xf32, #tpu.memory_space<vmem>>, vector<1x256xf32>,
    return
  }
  func.func @transform_0(%arg0: i32, %arg1: memref<2xi32, #tpu.memory_space<smem>>) -> (i32, i32) {
    %c0_i32 = arith.constant 0 : i32
    %c0_i32_0 = arith.constant 0 : i32
    return %c0_i32, %arg0 : i32, i32
  }
  func.func @transform_1(%arg0: i32, %arg1: memref<2xi32, #tpu.memory_space<smem>>) -> (i32, i32) {
    %c0_i32 = arith.constant 0 : i32
    %c0_i32_0 = arith.constant 0 : i32
    %c0_i32_1 = arith.constant 0 : i32
    return %c0_i32, %c0_i32_0 : i32, i32
  }
  func.func @transform_2(%arg0: i32, %arg1: memref<2xi32, #tpu.memory_space<smem>>) -> (i32, i32) {
    %c0_i32 = arith.constant 0 : i32
    %c0_i32_0 = arith.constant 0 : i32
    %c0_i32_1 = arith.constant 0 : i32
    return %c0_i32, %c0_i32_0 : i32, i32
  }
  func.func @transform_3(%arg0: i32, %arg1: memref<2xi32, #tpu.memory_space<smem>>) -> (i32, i32, i32) {
    %0 = arith.index_cast %arg0 : i32 to index
    %1 = memref.load %arg1[%0] : memref<2xi32, #tpu.memory_space<smem>>
    %c0_i32 = arith.constant 0 : i32
    %c0_i32_0 = arith.constant 0 : i32
    %c0_i32_1 = arith.constant 0 : i32
    return %1, %c0_i32, %c0_i32_0 : i32, i32, i32
  }
  func.func @transform_4(%arg0: i32, %arg1: memref<2xi32, #tpu.memory_space<smem>>) -> (i32, i32, i32) {
    %0 = arith.index_cast %arg0 : i32 to index
    %1 = memref.load %arg1[%0] : memref<2xi32, #tpu.memory_space<smem>>
    %c0_i32 = arith.constant 0 : i32
    %c0_i32_0 = arith.constant 0 : i32
    %c0_i32_1 = arith.constant 0 : i32
    return %1, %c0_i32, %c0_i32_0 : i32, i32, i32
  }
  func.func @transform_5(%arg0: i32, %arg1: memref<2xi32, #tpu.memory_space<smem>>) -> (i32, i32, i32) {
    %0 = arith.index_cast %arg0 : i32 to index
    %1 = memref.load %arg1[%0] : memref<2xi32, #tpu.memory_space<smem>>
    %c0_i32 = arith.constant 0 : i32
    %c0_i32_0 = arith.constant 0 : i32
    %c0_i32_1 = arith.constant 0 : i32
    return %1, %c0_i32, %c0_i32_0 : i32, i32, i32
  }
  func.func @transform_6(%arg0: i32, %arg1: memref<2xi32, #tpu.memory_space<smem>>) -> (i32, i32, i32) {
    %0 = arith.index_cast %arg0 : i32 to index
    %1 = memref.load %arg1[%0] : memref<2xi32, #tpu.memory_space<smem>>
    %c0_i32 = arith.constant 0 : i32
    %c0_i32_0 = arith.constant 0 : i32
    %c0_i32_1 = arith.constant 0 : i32
    return %1, %c0_i32, %c0_i32_0 : i32, i32, i32
  }
  func.func @transform_7(%arg0: i32, %arg1: memref<2xi32, #tpu.memory_space<smem>>) -> (i32, i32) {
    %c0_i32 = arith.constant 0 : i32
    %c0_i32_0 = arith.constant 0 : i32
    %c0_i32_1 = arith.constant 0 : i32
    return %c0_i32, %c0_i32_0 : i32, i32
  }
  func.func @transform_8(%arg0: i32, %arg1: memref<2xi32, #tpu.memory_space<smem>>) -> (i32, i32) {
    %c0_i32 = arith.constant 0 : i32
    %c0_i32_0 = arith.constant 0 : i32
    %c0_i32_1 = arith.constant 0 : i32
    return %c0_i32, %c0_i32_0 : i32, i32
  }
  func.func @transform_9(%arg0: i32, %arg1: memref<2xi32, #tpu.memory_space<smem>>) -> (i32, i32) {
    %c0_i32 = arith.constant 0 : i32
    %c0_i32_0 = arith.constant 0 : i32
    %c0_i32_1 = arith.constant 0 : i32
    return %c0_i32, %c0_i32_0 : i32, i32
  }
  func.func @transform_10(%arg0: i32, %arg1: memref<2xi32, #tpu.memory_space<smem>>) -> (i32, i32) {
    %c0_i32 = arith.constant 0 : i32
    %c0_i32_0 = arith.constant 0 : i32
    return %c0_i32, %arg0 : i32, i32
  }
}

</mosaic_0001>

<llo_original>
// kernel: clause_decoder_forward.1
$region0: #{clause_decoder_forward.1}
  #allocation0 [shape = 'u32[]', space=smem, size = 0x4, offset = 0x4, fixed_abs, tag = 'smem constant byte address 0x4 - core index']
  #allocation1 [shape = 'u32[144,128]{1,0:T(1,128)}', space=vmem, size = 0x12000, scoped, tag = 'internal scratch']
  #allocation2 [shape = 's32[1]{0}', space=sflag, size = 0x4, scoped, tag = 'scoped memory for clause_decoder_forward.1']
  #allocation3 [shape = 'u8[512]{0}', space=smem, size = 0x200, scoped, tag = 'prefetched SMEM operand 0']
  %s0 = inlined_call_operand.hbm [shape: s32[2], index: 0, kind: input, shape index: {}]
  %s1 = inlined_call_operand.hbm [shape: s32[3,512], index: 1, kind: input, shape index: {}]
  %s2 = inlined_call_operand.hbm [shape: bf16[32,16], index: 2, kind: input, shape index: {}]
  %s3 = inlined_call_operand.hbm [shape: bf16[32,1], index: 3, kind: input, shape index: {}]
  %s4 = inlined_call_operand.hbm [shape: bf16[2,64,128], index: 4, kind: input, shape index: {}]
  %s5 = inlined_call_operand.hbm [shape: f32[2,64,1], index: 5, kind: input, shape index: {}]
  %s6 = inlined_call_operand.hbm [shape: bf16[2,32,64], index: 6, kind: input, shape index: {}]
  %s7 = inlined_call_operand.hbm [shape: f32[2,32,1], index: 7, kind: input, shape index: {}]
  %s8 = inlined_call_operand.hbm [shape: bf16[32,32], index: 8, kind: input, shape index: {}]
  %s9 = inlined_call_operand.hbm [shape: f32[32,1], index: 9, kind: input, shape index: {}]
  %s10 = inlined_call_operand.hbm [shape: f32[32,1], index: 10, kind: input, shape index: {}]
  %s11 = inlined_call_operand.hbm [shape: f32[1,512], index: 11, kind: output, shape index: {}]
  %s12 = sld [smem:[#allocation0]]
  $region113: #{clause_decoder_forward.1} parent=0
    _
  %s14 = ssub.s32 1, %s12
  %s15 = scalar_select 0, %s14, %s12
  %17 = dma.hbm_to_smem %s0, 16, [#allocation3], [#allocation2]
  %18 = dma.done [#allocation2], 16
  %19 = sfence
  $region1: #{clause_decoder_forward.1} parent=0
    #allocation4 [shape = 'u8[8192]{0}', space=vmem, size = 0x2000, scoped, tag = 'input window, operand 1']
    #allocation5 [shape = 's32[2]{0}', space=sflag, size = 0x8, scoped, tag = 'scoped memory for clause_decoder_forward.1']
    #allocation6 [shape = 's32[2]{0}', space=sflag, size = 0x8, scoped, tag = 'scoped memory for clause_decoder_forward.1']
    #allocation7 [shape = 'u8[8192]{0}', space=vmem, size = 0x2000, scoped, tag = 'input window, operand 2, single buffered']
    #allocation8 [shape = 's32[1]{0}', space=sflag, size = 0x4, scoped, tag = 'scoped memory for clause_decoder_forward.1']
    #allocation9 [shape = 'u8[8192]{0}', space=vmem, size = 0x2000, scoped, tag = 'input window, operand 3, single buffered']
    #allocation10 [shape = 'u8[32768]{0}', space=vmem, size = 0x8000, scoped, tag = 'input window, operand 4']
    #allocation11 [shape = 's32[2]{0}', space=sflag, size = 0x8, scoped, tag = 'scoped memory for clause_decoder_forward.1']
    #allocation12 [shape = 'u8[65536]{0}', space=vmem, size = 0x10000, scoped, tag = 'input window, operand 5']
    #allocation13 [shape = 'u8[16384]{0}', space=vmem, size = 0x4000, scoped, tag = 'input window, operand 6']
    #allocation14 [shape = 's32[2]{0}', space=sflag, size = 0x8, scoped, tag = 'scoped memory for clause_decoder_forward.1']
    #allocation15 [shape = 'u8[32768]{0}', space=vmem, size = 0x8000, scoped, tag = 'input window, operand 7']
    #allocation16 [shape = 'u8[8192]{0}', space=vmem, size = 0x2000, scoped, tag = 'input window, operand 8, single buffered']
    #allocation17 [shape = 's32[1]{0}', space=sflag, size = 0x4, scoped, tag = 'scoped memory for clause_decoder_forward.1']
    #allocation18 [shape = 'u8[16384]{0}', space=vmem, size = 0x4000, scoped, tag = 'input window, operand 9, single buffered']
    #allocation19 [shape = 'u8[16384]{0}', space=vmem, size = 0x4000, scoped, tag = 'input window, operand 10, single buffered']
    #allocation20 [shape = 's32[1]{0}', space=sflag, size = 0x4, scoped, tag = 'scoped memory for clause_decoder_forward.1']
    #allocation21 [shape = 'u8[2048]{0}', space=vmem, size = 0x800, scoped, tag = 'output window, operand 0']
    %20 = vsyncpa [#allocation5], 0
    %s21 = scalar_lea.sflag [#allocation5], 1
    %22 = vsyncpa %s21, 0
    %23 = vsyncpa [#allocation8], 0
    %24 = vsyncpa [#allocation11], 0
    %s25 = scalar_lea.sflag [#allocation11], 1
    %26 = vsyncpa %s25, 0
    %27 = vsyncpa [#allocation14], 0
    %s28 = scalar_lea.sflag [#allocation14], 1
    %29 = vsyncpa %s28, 0
    %30 = vsyncpa [#allocation17], 0
    %31 = vsyncpa [#allocation20], 0
    %32 = vsyncpa [#allocation6], 0
    %s33 = scalar_lea.sflag [#allocation6], 1
    %34 = vsyncpa %s33, 0
    loop: start=0, step=1, limit=4
    $region2: #{clause_decoder_forward.1} parent=1 // loop_pre_header
      _
    $region3: #{clause_decoder_forward.1} parent=1 // loop_header
      %s36 = sphi 0, %s40
      %p37 = scmp.ge.s32.totalorder %s36, 4
      %s46 = sphi 0, %s48
      %s49 = sphi 0, %s46
      %s50 = sphi 0, %s49
      %s66 = sphi 0, %s50
      %s70 = sphi 0, %s70
      %s72 = sphi 0, %s70
      %s73 = sphi 0, %s72
      %s87 = sphi 0, %s73
      %s91 = sphi 0, %s91
      %s93 = sphi 0, %s91
      %s94 = sphi 0, %s93
      %s108 = sphi 0, %s94
      %s116 = sphi 0, %s118
      %s119 = sphi 0, %s116
      %s120 = sphi 0, %s119
      %s136 = sphi 0, %s120
      %s144 = sphi 0, %s146
      %s147 = sphi 0, %s144
      %s148 = sphi 0, %s147
      %s164 = sphi 0, %s148
      %s172 = sphi 0, %s174
      %s175 = sphi 0, %s172
      %s176 = sphi 0, %s175
      %s192 = sphi 0, %s176
      %s200 = sphi 0, %s202
      %s203 = sphi 0, %s200
      %s204 = sphi 0, %s203
      %s220 = sphi 0, %s204
      %s224 = sphi 0, %s224
      %s226 = sphi 0, %s224
      %s227 = sphi 0, %s226
      %s241 = sphi 0, %s227
      %s245 = sphi 0, %s245
      %s247 = sphi 0, %s245
      %s248 = sphi 0, %s247
      %s262 = sphi 0, %s248
      %s266 = sphi 0, %s266
      %s268 = sphi 0, %s266
      %s269 = sphi 0, %s268
      %s283 = sphi 0, %s269
      %s289 = sphi 0, %s291
      %s292 = sphi 0, %s289
      %s293 = sphi 0, %s292
      %s309 = sphi 0, %s293
    $region4: #{clause_decoder_forward.1} parent=1 // loop_header_branch
      %39 = sbr.rel (%p37) target = $region8
    $region5: #{clause_decoder_forward.1} parent=1 // loop_body
      %s41 = ssub.s32 %s36, 1
      %s42 = ssub.s32 %s36, 2
      %s43 = sadd.s32 %s36, 1
      %s44 = ssub.s32 %s36, %s43
      %p45 = scmp.eq.s32.totalorder %s44, 0
      %s47 = sadd.s32 %s46, 1
      %s48 = scalar_select %p45, %s46, %s47
      %p51 = pneg %p45
      %p52 = scmp.eq.s32.totalorder %s36, 1
      %p53 = por %p51, %p52
      %p54 = scmp.ne.s32.totalorder %s46, %s49
      %p55 = scmp.eq.s32.totalorder %s36, 0
      %p56 = por %p54, %p55
      %p57 = scmp.ne.s32.totalorder %s46, %s49
      %p58 = scmp.eq.s32.totalorder %s41, 1
      %p59 = por %p57, %p58
      %p60 = scmp.ne.s32.totalorder %s49, %s50
      %p61 = scmp.eq.s32.totalorder %s41, 0
      %p62 = por %p60, %p61
      %p63 = scmp.ne.s32.totalorder %s49, %s50
      %p64 = scmp.eq.s32.totalorder %s42, 1
      %p65 = por %p63, %p64
      %p67 = scmp.ne.s32.totalorder %s50, %s66
      %p68 = scmp.eq.s32.totalorder %s42, 0
      %p69 = por %p67, %p68
      %s71 = sadd.s32 %s70, 1
      %p74 = scmp.eq.s32.totalorder %s36, 1
      %p75 = scmp.ne.s32.totalorder %s70, %s72
      %p76 = scmp.eq.s32.totalorder %s36, 0
      %p77 = por %p75, %p76
      %p78 = scmp.ne.s32.totalorder %s70, %s72
      %p79 = scmp.eq.s32.totalorder %s41, 1
      %p80 = por %p78, %p79
      %p81 = scmp.ne.s32.totalorder %s72, %s73
      %p82 = scmp.eq.s32.totalorder %s41, 0
      %p83 = por %p81, %p82
      %p84 = scmp.ne.s32.totalorder %s72, %s73
      %p85 = scmp.eq.s32.totalorder %s42, 1
      %p86 = por %p84, %p85
      %p88 = scmp.ne.s32.totalorder %s73, %s87
      %p89 = scmp.eq.s32.totalorder %s42, 0
      %p90 = por %p88, %p89
      %s92 = sadd.s32 %s91, 1
      %p95 = scmp.eq.s32.totalorder %s36, 1
      %p96 = scmp.ne.s32.totalorder %s91, %s93
      %p97 = scmp.eq.s32.totalorder %s36, 0
      %p98 = por %p96, %p97
      %p99 = scmp.ne.s32.totalorder %s91, %s93
      %p100 = scmp.eq.s32.totalorder %s41, 1
      %p101 = por %p99, %p100
      %p102 = scmp.ne.s32.totalorder %s93, %s94
      %p103 = scmp.eq.s32.totalorder %s41, 0
      %p104 = por %p102, %p103
      %p105 = scmp.ne.s32.totalorder %s93, %s94
      %p106 = scmp.eq.s32.totalorder %s42, 1
      %p107 = por %p105, %p106
      %p109 = scmp.ne.s32.totalorder %s94, %s108
      %p110 = scmp.eq.s32.totalorder %s42, 0
      %p111 = por %p109, %p110
      %s112 = sld [smem:[#allocation3 + %s36]]
      %s113 = sld [smem:[#allocation3 + %s43]]
      %s114 = ssub.s32 %s112, %s113
      %p115 = scmp.eq.s32.totalorder %s114, 0
      %s117 = sadd.s32 %s116, 1
      %s118 = scalar_select %p115, %s116, %s117
      %p121 = pneg %p115
      %p122 = scmp.eq.s32.totalorder %s36, 1
      %p123 = por %p121, %p122
      %p124 = scmp.ne.s32.totalorder %s116, %s119
      %p125 = scmp.eq.s32.totalorder %s36, 0
      %p126 = por %p124, %p125
      %p127 = scmp.ne.s32.totalorder %s116, %s119
      %p128 = scmp.eq.s32.totalorder %s41, 1
      %p129 = por %p127, %p128
      %p130 = scmp.ne.s32.totalorder %s119, %s120
      %p131 = scmp.eq.s32.totalorder %s41, 0
      %p132 = por %p130, %p131
      %p133 = scmp.ne.s32.totalorder %s119, %s120
      %p134 = scmp.eq.s32.totalorder %s42, 1
      %p135 = por %p133, %p134
      %p137 = scmp.ne.s32.totalorder %s120, %s136
      %p138 = scmp.eq.s32.totalorder %s42, 0
      %p139 = por %p137, %p138
      %s140 = sld [smem:[#allocation3 + %s36]]
      %s141 = sld [smem:[#allocation3 + %s43]]
      %s142 = ssub.s32 %s140, %s141
      %p143 = scmp.eq.s32.totalorder %s142, 0
      %s145 = sadd.s32 %s144, 1
      %s146 = scalar_select %p143, %s144, %s145
      %p149 = pneg %p143
      %p150 = scmp.eq.s32.totalorder %s36, 1
      %p151 = por %p149, %p150
      %p152 = scmp.ne.s32.totalorder %s144, %s147
      %p153 = scmp.eq.s32.totalorder %s36, 0
      %p154 = por %p152, %p153
      %p155 = scmp.ne.s32.totalorder %s144, %s147
      %p156 = scmp.eq.s32.totalorder %s41, 1
      %p157 = por %p155, %p156
      %p158 = scmp.ne.s32.totalorder %s147, %s148
      %p159 = scmp.eq.s32.totalorder %s41, 0
      %p160 = por %p158, %p159
      %p161 = scmp.ne.s32.totalorder %s147, %s148
      %p162 = scmp.eq.s32.totalorder %s42, 1
      %p163 = por %p161, %p162
      %p165 = scmp.ne.s32.totalorder %s148, %s164
      %p166 = scmp.eq.s32.totalorder %s42, 0
      %p167 = por %p165, %p166
      %s168 = sld [smem:[#allocation3 + %s36]]
      %s169 = sld [smem:[#allocation3 + %s43]]
      %s170 = ssub.s32 %s168, %s169
      %p171 = scmp.eq.s32.totalorder %s170, 0
      %s173 = sadd.s32 %s172, 1
      %s174 = scalar_select %p171, %s172, %s173
      %p177 = pneg %p171
      %p178 = scmp.eq.s32.totalorder %s36, 1
      %p179 = por %p177, %p178
      %p180 = scmp.ne.s32.totalorder %s172, %s175
      %p181 = scmp.eq.s32.totalorder %s36, 0
      %p182 = por %p180, %p181
      %p183 = scmp.ne.s32.totalorder %s172, %s175
      %p184 = scmp.eq.s32.totalorder %s41, 1
      %p185 = por %p183, %p184
      %p186 = scmp.ne.s32.totalorder %s175, %s176
      %p187 = scmp.eq.s32.totalorder %s41, 0
      %p188 = por %p186, %p187
      %p189 = scmp.ne.s32.totalorder %s175, %s176
      %p190 = scmp.eq.s32.totalorder %s42, 1
      %p191 = por %p189, %p190
      %p193 = scmp.ne.s32.totalorder %s176, %s192
      %p194 = scmp.eq.s32.totalorder %s42, 0
      %p195 = por %p193, %p194
      %s196 = sld [smem:[#allocation3 + %s36]]
      %s197 = sld [smem:[#allocation3 + %s43]]
      %s198 = ssub.s32 %s196, %s197
      %p199 = scmp.eq.s32.totalorder %s198, 0
      %s201 = sadd.s32 %s200, 1
      %s202 = scalar_select %p199, %s200, %s201
      %p205 = pneg %p199
      %p206 = scmp.eq.s32.totalorder %s36, 1
      %p207 = por %p205, %p206
      %p208 = scmp.ne.s32.totalorder %s200, %s203
      %p209 = scmp.eq.s32.totalorder %s36, 0
      %p210 = por %p208, %p209
      %p211 = scmp.ne.s32.totalorder %s200, %s203
      %p212 = scmp.eq.s32.totalorder %s41, 1
      %p213 = por %p211, %p212
      %p214 = scmp.ne.s32.totalorder %s203, %s204
      %p215 = scmp.eq.s32.totalorder %s41, 0
      %p216 = por %p214, %p215
      %p217 = scmp.ne.s32.totalorder %s203, %s204
      %p218 = scmp.eq.s32.totalorder %s42, 1
      %p219 = por %p217, %p218
      %p221 = scmp.ne.s32.totalorder %s204, %s220
      %p222 = scmp.eq.s32.totalorder %s42, 0
      %p223 = por %p221, %p222
      %s225 = sadd.s32 %s224, 1
      %p228 = scmp.eq.s32.totalorder %s36, 1
      %p229 = scmp.ne.s32.totalorder %s224, %s226
      %p230 = scmp.eq.s32.totalorder %s36, 0
      %p231 = por %p229, %p230
      %p232 = scmp.ne.s32.totalorder %s224, %s226
      %p233 = scmp.eq.s32.totalorder %s41, 1
      %p234 = por %p232, %p233
      %p235 = scmp.ne.s32.totalorder %s226, %s227
      %p236 = scmp.eq.s32.totalorder %s41, 0
      %p237 = por %p235, %p236
      %p238 = scmp.ne.s32.totalorder %s226, %s227
      %p239 = scmp.eq.s32.totalorder %s42, 1
      %p240 = por %p238, %p239
      %p242 = scmp.ne.s32.totalorder %s227, %s241
      %p243 = scmp.eq.s32.totalorder %s42, 0
      %p244 = por %p242, %p243
      %s246 = sadd.s32 %s245, 1
      %p249 = scmp.eq.s32.totalorder %s36, 1
      %p250 = scmp.ne.s32.totalorder %s245, %s247
      %p251 = scmp.eq.s32.totalorder %s36, 0
      %p252 = por %p250, %p251
      %p253 = scmp.ne.s32.totalorder %s245, %s247
      %p254 = scmp.eq.s32.totalorder %s41, 1
      %p255 = por %p253, %p254
      %p256 = scmp.ne.s32.totalorder %s247, %s248
      %p257 = scmp.eq.s32.totalorder %s41, 0
      %p258 = por %p256, %p257
      %p259 = scmp.ne.s32.totalorder %s247, %s248
      %p260 = scmp.eq.s32.totalorder %s42, 1
      %p261 = por %p259, %p260
      %p263 = scmp.ne.s32.totalorder %s248, %s262
      %p264 = scmp.eq.s32.totalorder %s42, 0
      %p265 = por %p263, %p264
      %s267 = sadd.s32 %s266, 1
      %p270 = scmp.eq.s32.totalorder %s36, 1
      %p271 = scmp.ne.s32.totalorder %s266, %s268
      %p272 = scmp.eq.s32.totalorder %s36, 0
      %p273 = por %p271, %p272
      %p274 = scmp.ne.s32.totalorder %s266, %s268
      %p275 = scmp.eq.s32.totalorder %s41, 1
      %p276 = por %p274, %p275
      %p277 = scmp.ne.s32.totalorder %s268, %s269
      %p278 = scmp.eq.s32.totalorder %s41, 0
      %p279 = por %p277, %p278
      %p280 = scmp.ne.s32.totalorder %s268, %s269
      %p281 = scmp.eq.s32.totalorder %s42, 1
      %p282 = por %p280, %p281
      %p284 = scmp.ne.s32.totalorder %s269, %s283
      %p285 = scmp.eq.s32.totalorder %s42, 0
      %p286 = por %p284, %p285
      %s287 = ssub.s32 %s36, %s43
      %p288 = scmp.eq.s32.totalorder %s287, 0
      %s290 = sadd.s32 %s289, 1
      %s291 = scalar_select %p288, %s289, %s290
      %p294 = pneg %p288
      %p295 = scmp.eq.s32.totalorder %s36, 1
      %p296 = por %p294, %p295
      %p297 = scmp.ne.s32.totalorder %s289, %s292
      %p298 = scmp.eq.s32.totalorder %s36, 0
      %p299 = por %p297, %p298
      %p300 = scmp.ne.s32.totalorder %s289, %s292
      %p301 = scmp.eq.s32.totalorder %s41, 1
      %p302 = por %p300, %p301
      %p303 = scmp.ne.s32.totalorder %s292, %s293
      %p304 = scmp.eq.s32.totalorder %s41, 0
      %p305 = por %p303, %p304
      %p306 = scmp.ne.s32.totalorder %s292, %s293
      %p307 = scmp.eq.s32.totalorder %s42, 1
      %p308 = por %p306, %p307
      %p310 = scmp.ne.s32.totalorder %s293, %s309
      %p311 = scmp.eq.s32.totalorder %s42, 0
      %p312 = por %p310, %p311
      %p313 = scmp.le.s32.totalorder 1, %s36
      %p314 = scmp.lt.s32.totalorder %s36, 3
      %p315 = pnand %p313, %p314
      %p316 = pneg %p315
      // Predicated region
      $region9: #{clause_decoder_forward.1} parent=5 // pred_check
        _
      $region10: #{clause_decoder_forward.1} parent=5 // pred_check_branch
        %318 = sbr.rel (%p315) target = $region12
      $region11: #{clause_decoder_forward.1} parent=5 // pred_region
        %s319 = ssub.s32 %s36, 1
        // Predicated region
        $region13: #{clause_decoder_forward.1} parent=11 // pred_check
          %p320 = pneg %p83
        $region14: #{clause_decoder_forward.1} parent=11 // pred_check_branch
          %322 = sbr.rel (%p320) target = $region16
        $region15: #{clause_decoder_forward.1} parent=11 // pred_region
          %s324 = ssub.s32 256, 256
          %325 = vsyncadd [#allocation8], %s324
          %s326 = sshll.u32 [#allocation7], 4
          %s327 = int_to_ptr.vmem [resolvable:$true] %s326
          %332 = dma.hbm_to_vmem [thread:$0]  %s2, 256, %s327, [#allocation8], 64, 64, 4
        $region16: #{clause_decoder_forward.1} parent=11 // pred_fallthru
          _
        // Predicated region
        $region17: #{clause_decoder_forward.1} parent=11 // pred_check
          %p333 = pneg %p104
        $region18: #{clause_decoder_forward.1} parent=11 // pred_check_branch
          %335 = sbr.rel (%p333) target = $region20
        $region19: #{clause_decoder_forward.1} parent=11 // pred_region
          %s337 = ssub.s32 256, 256
          %338 = vsyncadd [#allocation8], %s337
          %s339 = sshll.u32 [#allocation9], 4
          %s340 = int_to_ptr.vmem [resolvable:$true] %s339
          %345 = dma.hbm_to_vmem [thread:$0]  %s3, 256, %s340, [#allocation8], 64, 64, 4
        $region20: #{clause_decoder_forward.1} parent=11 // pred_fallthru
          _
        // Predicated region
        $region21: #{clause_decoder_forward.1} parent=11 // pred_check
          %p346 = pneg %p237
        $region22: #{clause_decoder_forward.1} parent=11 // pred_check_branch
          %348 = sbr.rel (%p346) target = $region24
        $region23: #{clause_decoder_forward.1} parent=11 // pred_region
          %s350 = ssub.s32 256, 256
          %351 = vsyncadd [#allocation17], %s350
          %s352 = sshll.u32 [#allocation16], 4
          %s353 = int_to_ptr.vmem [resolvable:$true] %s352
          %358 = dma.hbm_to_vmem [thread:$0]  %s8, 256, %s353, [#allocation17], 64, 64, 4
        $region24: #{clause_decoder_forward.1} parent=11 // pred_fallthru
          _
        // Predicated region
        $region25: #{clause_decoder_forward.1} parent=11 // pred_check
          %p359 = pneg %p258
        $region26: #{clause_decoder_forward.1} parent=11 // pred_check_branch
          %361 = sbr.rel (%p359) target = $region28
        $region27: #{clause_decoder_forward.1} parent=11 // pred_region
          %s363 = ssub.s32 512, 512
          %364 = vsyncadd [#allocation17], %s363
          %s365 = sshll.u32 [#allocation18], 4
          %s366 = int_to_ptr.vmem [resolvable:$true] %s365
          %371 = dma.hbm_to_vmem [thread:$0]  %s9, 512, %s366, [#allocation17], 128, 128, 8
        $region28: #{clause_decoder_forward.1} parent=11 // pred_fallthru
          _
        // Predicated region
        $region29: #{clause_decoder_forward.1} parent=11 // pred_check
          %p372 = pneg %p279
        $region30: #{clause_decoder_forward.1} parent=11 // pred_check_branch
          %374 = sbr.rel (%p372) target = $region32
        $region31: #{clause_decoder_forward.1} parent=11 // pred_region
          %s376 = ssub.s32 512, 512
          %377 = vsyncadd [#allocation20], %s376
          %s378 = sshll.u32 [#allocation19], 4
          %s379 = int_to_ptr.vmem [resolvable:$true] %s378
          %384 = dma.hbm_to_vmem [thread:$0]  %s10, 512, %s379, [#allocation20], 128, 128, 8
        $region32: #{clause_decoder_forward.1} parent=11 // pred_fallthru
          _
      $region12: #{clause_decoder_forward.1} parent=5 // pred_fallthru
        _
      %p385 = scmp.lt.s32.totalorder %s36, 2
      // Predicated region
      $region33: #{clause_decoder_forward.1} parent=5 // pred_check
        %p386 = pneg %p385
      $region34: #{clause_decoder_forward.1} parent=5 // pred_check_branch
        %388 = sbr.rel (%p386) target = $region36
      $region35: #{clause_decoder_forward.1} parent=5 // pred_region
        // Predicated region
        $region37: #{clause_decoder_forward.1} parent=35 // pred_check
          %p389 = pneg %p56
        $region38: #{clause_decoder_forward.1} parent=35 // pred_check_branch
          %391 = sbr.rel (%p389) target = $region40
        $region39: #{clause_decoder_forward.1} parent=35 // pred_region
          %s392 = sand.u32 %s46, 1
          %s393 = scalar_lea.sflag [#allocation5], %s392
          %s394 = sand.u32 %s46, 1
          %s395 = smul.addr %s394, 8
          %s396 = scalar_lea.vmem [#allocation4], %s395
          %s397 = smul.u32 2, %s36
          %s399 = ssub.s32 128, 128
          %400 = vsyncadd %s393, %s399
          %s401 = smul.addr %s397, 64
          %s402 = scalar_lea.hbm %s1, %s401
          %s404 = sshll.u32 %s396, 4
          %s405 = int_to_ptr.vmem [resolvable:$true] %s404
          %407 = dma.hbm_to_vmem [thread:$0]  %s402, 128, %s405, %s393
        $region40: #{clause_decoder_forward.1} parent=35 // pred_fallthru
          _
        // Predicated region
        $region41: #{clause_decoder_forward.1} parent=35 // pred_check
          %p408 = pneg %p126
        $region42: #{clause_decoder_forward.1} parent=35 // pred_check_branch
          %410 = sbr.rel (%p408) target = $region44
        $region43: #{clause_decoder_forward.1} parent=35 // pred_region
          %s411 = sand.u32 %s36, 1
          %s412 = scalar_lea.sflag [#allocation11], %s411
          %s413 = sand.u32 %s116, 1
          %s414 = smul.addr %s413, 32
          %s415 = scalar_lea.vmem [#allocation10], %s414
          %s416 = sld [smem:[#allocation3 + %s36]]
          %s418 = ssub.s32 512, 512
          %419 = vsyncadd %s412, %s418
          %s420 = smul.addr %s416, 8
          %s421 = smul.addr %s420, 64
          %s422 = scalar_lea.hbm %s4, %s421
          %s423 = sshll.u32 %s415, 4
          %s424 = int_to_ptr.vmem [resolvable:$true] %s423
          %429 = dma.hbm_to_vmem [thread:$0]  %s422, 512, %s424, %s412, 64, 64, 4
        $region44: #{clause_decoder_forward.1} parent=35 // pred_fallthru
          _
        // Predicated region
        $region45: #{clause_decoder_forward.1} parent=35 // pred_check
          %p430 = pneg %p154
        $region46: #{clause_decoder_forward.1} parent=35 // pred_check_branch
          %432 = sbr.rel (%p430) target = $region48
        $region47: #{clause_decoder_forward.1} parent=35 // pred_region
          %s433 = sand.u32 %s36, 1
          %s434 = scalar_lea.sflag [#allocation11], %s433
          %s435 = sand.u32 %s144, 1
          %s436 = smul.addr %s435, 64
          %s437 = scalar_lea.vmem [#allocation12], %s436
          %s438 = sld [smem:[#allocation3 + %s36]]
          %s440 = ssub.s32 1024, 1024
          %441 = vsyncadd %s434, %s440
          %s442 = smul.addr %s438, 8
          %s443 = smul.addr %s442, 128
          %s444 = scalar_lea.hbm %s5, %s443
          %s445 = sshll.u32 %s437, 4
          %s446 = int_to_ptr.vmem [resolvable:$true] %s445
          %451 = dma.hbm_to_vmem [thread:$0]  %s444, 1024, %s446, %s434, 128, 128, 8
        $region48: #{clause_decoder_forward.1} parent=35 // pred_fallthru
          _
        // Predicated region
        $region49: #{clause_decoder_forward.1} parent=35 // pred_check
          %p452 = pneg %p182
        $region50: #{clause_decoder_forward.1} parent=35 // pred_check_branch
          %454 = sbr.rel (%p452) target = $region52
        $region51: #{clause_decoder_forward.1} parent=35 // pred_region
          %s455 = sand.u32 %s36, 1
          %s456 = scalar_lea.sflag [#allocation14], %s455
          %s457 = sand.u32 %s172, 1
          %s458 = smul.addr %s457, 16
          %s459 = scalar_lea.vmem [#allocation13], %s458
          %s460 = sld [smem:[#allocation3 + %s36]]
          %s462 = ssub.s32 256, 256
          %463 = vsyncadd %s456, %s462
          %s464 = smul.addr %s460, 4
          %s465 = smul.addr %s464, 64
          %s466 = scalar_lea.hbm %s6, %s465
          %s467 = sshll.u32 %s459, 4
          %s468 = int_to_ptr.vmem [resolvable:$true] %s467
          %473 = dma.hbm_to_vmem [thread:$0]  %s466, 256, %s468, %s456, 64, 64, 4
        $region52: #{clause_decoder_forward.1} parent=35 // pred_fallthru
          _
        // Predicated region
        $region53: #{clause_decoder_forward.1} parent=35 // pred_check
          %p474 = pneg %p210
        $region54: #{clause_decoder_forward.1} parent=35 // pred_check_branch
          %476 = sbr.rel (%p474) target = $region56
        $region55: #{clause_decoder_forward.1} parent=35 // pred_region
          %s477 = sand.u32 %s36, 1
          %s478 = scalar_lea.sflag [#allocation14], %s477
          %s479 = sand.u32 %s200, 1
          %s480 = smul.addr %s479, 32
          %s481 = scalar_lea.vmem [#allocation15], %s480
          %s482 = sld [smem:[#allocation3 + %s36]]
          %s484 = ssub.s32 512, 512
          %485 = vsyncadd %s478, %s484
          %s486 = smul.addr %s482, 4
          %s487 = smul.addr %s486, 128
          %s488 = scalar_lea.hbm %s7, %s487
          %s489 = sshll.u32 %s481, 4
          %s490 = int_to_ptr.vmem [resolvable:$true] %s489
          %495 = dma.hbm_to_vmem [thread:$0]  %s488, 512, %s490, %s478, 128, 128, 8
        $region56: #{clause_decoder_forward.1} parent=35 // pred_fallthru
          _
      $region36: #{clause_decoder_forward.1} parent=5 // pred_fallthru
        _
      %p496 = scmp.le.s32.totalorder 1, %s36
      %p497 = scmp.lt.s32.totalorder %s36, 3
      %p498 = pnand %p496, %p497
      %p499 = pneg %p498
      // Predicated region
      $region57: #{clause_decoder_forward.1} parent=5 // pred_check
        _
      $region58: #{clause_decoder_forward.1} parent=5 // pred_check_branch
        %501 = sbr.rel (%p498) target = $region60
      $region59: #{clause_decoder_forward.1} parent=5 // pred_region
        %s502 = ssub.s32 %s36, 1
        %s503 = sand.u32 %s49, 1
        %s504 = scalar_lea.sflag [#allocation5], %s503
        %s505 = sand.u32 %s49, 1
        %s506 = smul.addr %s505, 8
        %s507 = scalar_lea.vmem [#allocation4], %s506
        // Predicated region
        $region61: #{clause_decoder_forward.1} parent=59 // pred_check
          %p508 = pneg %p62
        $region62: #{clause_decoder_forward.1} parent=59 // pred_check_branch
          %510 = sbr.rel (%p508) target = $region64
        $region63: #{clause_decoder_forward.1} parent=59 // pred_region
          %511 = dma.done %s504, 128
        $region64: #{clause_decoder_forward.1} parent=59 // pred_fallthru
          _
        // Predicated region
        $region65: #{clause_decoder_forward.1} parent=59 // pred_check
          %p512 = pneg %p83
        $region66: #{clause_decoder_forward.1} parent=59 // pred_check_branch
          %514 = sbr.rel (%p512) target = $region68
        $region67: #{clause_decoder_forward.1} parent=59 // pred_region
          %515 = dma.done [#allocation8], 256
        $region68: #{clause_decoder_forward.1} parent=59 // pred_fallthru
          _
        // Predicated region
        $region69: #{clause_decoder_forward.1} parent=59 // pred_check
          %p516 = pneg %p104
        $region70: #{clause_decoder_forward.1} parent=59 // pred_check_branch
          %518 = sbr.rel (%p516) target = $region72
        $region71: #{clause_decoder_forward.1} parent=59 // pred_region
          %519 = dma.done [#allocation8], 256
        $region72: #{clause_decoder_forward.1} parent=59 // pred_fallthru
          _
        %s520 = sand.u32 %s41, 1
        %s521 = scalar_lea.sflag [#allocation11], %s520
        %s522 = sand.u32 %s119, 1
        %s523 = smul.addr %s522, 32
        %s524 = scalar_lea.vmem [#allocation10], %s523
        // Predicated region
        $region73: #{clause_decoder_forward.1} parent=59 // pred_check
          %p525 = pneg %p132
        $region74: #{clause_decoder_forward.1} parent=59 // pred_check_branch
          %527 = sbr.rel (%p525) target = $region76
        $region75: #{clause_decoder_forward.1} parent=59 // pred_region
          %528 = dma.done %s521, 512
        $region76: #{clause_decoder_forward.1} parent=59 // pred_fallthru
          _
        %s529 = sand.u32 %s41, 1
        %s530 = scalar_lea.sflag [#allocation11], %s529
        %s531 = sand.u32 %s147, 1
        %s532 = smul.addr %s531, 64
        %s533 = scalar_lea.vmem [#allocation12], %s532
        // Predicated region
        $region77: #{clause_decoder_forward.1} parent=59 // pred_check
          %p534 = pneg %p160
        $region78: #{clause_decoder_forward.1} parent=59 // pred_check_branch
          %536 = sbr.rel (%p534) target = $region80
        $region79: #{clause_decoder_forward.1} parent=59 // pred_region
          %537 = dma.done %s530, 1024
        $region80: #{clause_decoder_forward.1} parent=59 // pred_fallthru
          _
        %s538 = sand.u32 %s41, 1
        %s539 = scalar_lea.sflag [#allocation14], %s538
        %s540 = sand.u32 %s175, 1
        %s541 = smul.addr %s540, 16
        %s542 = scalar_lea.vmem [#allocation13], %s541
        // Predicated region
        $region81: #{clause_decoder_forward.1} parent=59 // pred_check
          %p543 = pneg %p188
        $region82: #{clause_decoder_forward.1} parent=59 // pred_check_branch
          %545 = sbr.rel (%p543) target = $region84
        $region83: #{clause_decoder_forward.1} parent=59 // pred_region
          %546 = dma.done %s539, 256
        $region84: #{clause_decoder_forward.1} parent=59 // pred_fallthru
          _
        %s547 = sand.u32 %s41, 1
        %s548 = scalar_lea.sflag [#allocation14], %s547
        %s549 = sand.u32 %s203, 1
        %s550 = smul.addr %s549, 32
        %s551 = scalar_lea.vmem [#allocation15], %s550
        // Predicated region
        $region85: #{clause_decoder_forward.1} parent=59 // pred_check
          %p552 = pneg %p216
        $region86: #{clause_decoder_forward.1} parent=59 // pred_check_branch
          %554 = sbr.rel (%p552) target = $region88
        $region87: #{clause_decoder_forward.1} parent=59 // pred_region
          %555 = dma.done %s548, 512
        $region88: #{clause_decoder_forward.1} parent=59 // pred_fallthru
          _
        // Predicated region
        $region89: #{clause_decoder_forward.1} parent=59 // pred_check
          %p556 = pneg %p237
        $region90: #{clause_decoder_forward.1} parent=59 // pred_check_branch
          %558 = sbr.rel (%p556) target = $region92
        $region91: #{clause_decoder_forward.1} parent=59 // pred_region
          %559 = dma.done [#allocation17], 256
        $region92: #{clause_decoder_forward.1} parent=59 // pred_fallthru
          _
        // Predicated region
        $region93: #{clause_decoder_forward.1} parent=59 // pred_check
          %p560 = pneg %p258
        $region94: #{clause_decoder_forward.1} parent=59 // pred_check_branch
          %562 = sbr.rel (%p560) target = $region96
        $region95: #{clause_decoder_forward.1} parent=59 // pred_region
          %563 = dma.done [#allocation17], 512
        $region96: #{clause_decoder_forward.1} parent=59 // pred_fallthru
          _
        // Predicated region
        $region97: #{clause_decoder_forward.1} parent=59 // pred_check
          %p564 = pneg %p279
        $region98: #{clause_decoder_forward.1} parent=59 // pred_check_branch
          %566 = sbr.rel (%p564) target = $region100
        $region99: #{clause_decoder_forward.1} parent=59 // pred_region
          %567 = dma.done [#allocation20], 512
        $region100: #{clause_decoder_forward.1} parent=59 // pred_fallthru
          _
        %s568 = sand.u32 %s49, 1
        %s569 = scalar_lea.sflag [#allocation5], %s568
        %s570 = sand.u32 %s49, 1
        %s571 = smul.addr %s570, 8
        %s572 = scalar_lea.vmem [#allocation4], %s571
        %p573 = pneg %p62
        %p574 = pneg %p59
        %p575 = pneg %p83
        %p576 = pneg %p80
        %p577 = pneg %p104
        %p578 = pneg %p101
        %s579 = sand.u32 %s41, 1
        %s580 = scalar_lea.sflag [#allocation11], %s579
        %s581 = sand.u32 %s119, 1
        %s582 = smul.addr %s581, 32
        %s583 = scalar_lea.vmem [#allocation10], %s582
        %p584 = pneg %p132
        %p585 = pneg %p129
        %s586 = sand.u32 %s41, 1
        %s587 = scalar_lea.sflag [#allocation11], %s586
        %s588 = sand.u32 %s147, 1
        %s589 = smul.addr %s588, 64
        %s590 = scalar_lea.vmem [#allocation12], %s589
        %p591 = pneg %p160
        %p592 = pneg %p157
        %s593 = sand.u32 %s41, 1
        %s594 = scalar_lea.sflag [#allocation14], %s593
        %s595 = sand.u32 %s175, 1
        %s596 = smul.addr %s595, 16
        %s597 = scalar_lea.vmem [#allocation13], %s596
        %p598 = pneg %p188
        %p599 = pneg %p185
        %s600 = sand.u32 %s41, 1
        %s601 = scalar_lea.sflag [#allocation14], %s600
        %s602 = sand.u32 %s203, 1
        %s603 = smul.addr %s602, 32
        %s604 = scalar_lea.vmem [#allocation15], %s603
        %p605 = pneg %p216
        %p606 = pneg %p213
        %p607 = pneg %p237
        %p608 = pneg %p234
        %p609 = pneg %p258
        %p610 = pneg %p255
        %p611 = pneg %p279
        %p612 = pneg %p276
        %p613 = pneg %p305
        %p614 = pneg %p302
        %s615 = sand.u32 %s292, 1
        %s616 = scalar_lea.sflag [#allocation6], %s615
        %s617 = sand.u32 %s292, 1
        %s618 = smul.addr %s617, 2
        %s619 = scalar_lea.vmem [#allocation21], %s618
        %s620 = smul.u32 2, %s41
        %s621 = sld [smem:[#allocation3 + %s41]]
        %s622 = sld [smem:[#allocation3 + %s41]]
        %s623 = sld [smem:[#allocation3 + %s41]]
        %s624 = sld [smem:[#allocation3 + %s41]]
        %s625 = smul.u32 2, %s41
        %v627 = vld [vmem:[%s507] sm:$0x77]
        %v628 = vld [vmem:[#allocation7] sm:$0xf]
        %v629 = vld [vmem:[#allocation7 + $0x4] sm:$0xf]
        %v630 = vld [vmem:[#allocation7 + $0x8] sm:$0xf]
        %v631 = vld [vmem:[#allocation7 + $0xc] sm:$0xf]
        %v632 = vlaneseq
        %v633 = vshrl.u32 %v632, 7
        %v634 = vadd.s32 %v633, 8
        %v635 = vlaneseq
        %v636 = vshrl.u32 %v635, 7
        %v637 = vsub.s32 0, %v636
        %v638 = vrot.slane %v627, %v637
        %v639 = vlaneseq
        %v640 = vshrl.u32 %v639, 7
        %v641 = vsub.s32 4, %v640
        %v642 = vrot.slane %v627, %v641
        %v643 = vlaneseq
        %v644 = vshrl.u32 %v643, 7
        %v645 = vsub.s32 0, %v644
        %v646 = vrot.slane %v638, %v645
        %v647 = vlaneseq
        %v648 = vshrl.u32 %v647, 7
        %v649 = vsub.s32 0, %v648
        %v650 = vrot.slane %v642, %v649
        %vm651 = vcmp.eq.s32.totalorder %v633, %v646
        %vm652 = vcmp.eq.s32.totalorder %v633, %v650
        %vm653 = vcmp.eq.s32.totalorder %v634, %v646
        %vm654 = vcmp.eq.s32.totalorder %v634, %v650
        %v655 = vsel %vm651, 1.0, 0.0
        %v656 = vsel %vm652, 1.0, 0.0
        %v657 = vsel %vm653, 1.0, 0.0
        %v658 = vsel %vm654, 1.0, 0.0
        %v659 = vpack.c.bf16 %v657, %v655
        %v660 = vpack.c.bf16 %v658, %v656
        %v665 = vunpack.c.l.b16 %v628
        %v666 = vunpack.c.l.b16 %v629
        %v667 = vunpack.c.l.b16 %v630
        %v668 = vunpack.c.l.b16 %v631
        %v669 = vpack.c.b16 %v666, %v665
        %v670 = vpack.c.b16 %v668, %v667
        %vm671 = vcmask 130048
        %v673 = vsel %vm671, %v669, 0
        %v676 = vsel %vm671, %v670, 0
        %678 = vmatprep.subr.bf16.mxu0 %v660
        %679 = vmatpush1.bf16.msra.mxu0 %v659
        %680 = vmatprep.subr.bf16.mxu0 0
        %681 = vmatpush1.bf16.msra.mxu0 0
        %682 = vmatprep.subr.bf16.mxu0 0
        %683 = vmatpush1.bf16.msra.mxu0 0
        %684 = vmatprep.subr.bf16.mxu0 0
        %685 = vmatpush1.bf16.msra.mxu0 0
        %686 = vmatprep.subr.bf16.mxu0 0
        %687 = vmatpush1.bf16.msra.mxu0 0
        %688 = vmatprep.subr.bf16.mxu0 0
        %689 = vmatpush1.bf16.msra.mxu0 0
        %690 = vmatprep.subr.bf16.mxu0 0
        %691 = vmatpush1.bf16.msra.mxu0 0
        %692 = vmatprep.subr.bf16.mxu0 0
        %693 = vmatpush1.bf16.msra.mxu0 0
        %694 = vmatprep.subr.bf16.mxu0 0
        %695 = vmatpush1.bf16.msra.mxu0 0
        %696 = vmatprep.subr.bf16.mxu0 0
        %697 = vmatpush1.bf16.msra.mxu0 0
        %698 = vmatprep.subr.bf16.mxu0 0
        %699 = vmatpush1.bf16.msra.mxu0 0
        %700 = vmatprep.subr.bf16.mxu0 0
        %701 = vmatpush1.bf16.msra.mxu0 0
        %702 = vmatprep.subr.bf16.mxu0 0
        %703 = vmatpush1.bf16.msra.mxu0 0
        %704 = vmatprep.subr.bf16.mxu0 0
        %705 = vmatpush1.bf16.msra.mxu0 0
        %706 = vmatprep.subr.bf16.mxu0 0
        %707 = vmatpush1.bf16.msra.mxu0 0
        %708 = vmatprep.subr.bf16.mxu0 0
        %709 = vmatpush1.bf16.msra.mxu0 0
        %710 = vmatprep.mubr.bf16.mxu0 0
        %711 = vmatmul.mubr.bf16.gmra.mrb[0].mxu0 %v673
        %v712 = vpop.f32.mrb[0].mxu0
        %v713 = vadd.f32 0.0, %v712
        %v714 = vpop.f32.mrb[0].mxu0
        %v715 = vadd.f32 0.0, %v714
        %v716 = vpop.f32.mrb[0].mxu0
        %v717 = vadd.f32 0.0, %v716
        %v718 = vpop.f32.mrb[0].mxu0
        %v719 = vadd.f32 0.0, %v718
        %720 = vmatprep.mubr.bf16.mxu0 0
        %721 = vmatmul.mubr.bf16.gmra.mrb[0].mxu0 %v676
        %v722 = vpop.f32.mrb[0].mxu0
        %v723 = vadd.f32 0.0, %v722
        %v724 = vpop.f32.mrb[0].mxu0
        %v725 = vadd.f32 0.0, %v724
        %v726 = vpop.f32.mrb[0].mxu0
        %v727 = vadd.f32 0.0, %v726
        %v728 = vpop.f32.mrb[0].mxu0
        %v729 = vadd.f32 0.0, %v728
        %730 = vdwg.mxu0
        %v731 = vpack.c.bf16 %v717, %v713
        %v732 = vpack.c.bf16 %v719, %v715
        %v733 = vpack.c.bf16 %v727, %v723
        %v734 = vpack.c.bf16 %v729, %v725
        %v735 = vlaneseq
        %v736 = vshrl.u32 %v735, 7
        %v737 = vsub.s32 1, %v736
        %v738 = vrot.slane %v627, %v737
        %v739 = vlaneseq
        %v740 = vshrl.u32 %v739, 7
        %v741 = vsub.s32 5, %v740
        %v742 = vrot.slane %v627, %v741
        %v743 = vlaneseq
        %v744 = vshrl.u32 %v743, 7
        %v745 = vsub.s32 1, %v744
        %v746 = vrot.slane %v738, %v745
        %v747 = vlaneseq
        %v748 = vshrl.u32 %v747, 7
        %v749 = vsub.s32 1, %v748
        %v750 = vrot.slane %v742, %v749
        %vm751 = vcmp.eq.s32.totalorder %v633, %v746
        %vm752 = vcmp.eq.s32.totalorder %v633, %v750
        %vm753 = vcmp.eq.s32.totalorder %v634, %v746
        %vm754 = vcmp.eq.s32.totalorder %v634, %v750
        %v755 = vsel %vm751, 1.0, 0.0
        %v756 = vsel %vm752, 1.0, 0.0
        %v757 = vsel %vm753, 1.0, 0.0
        %v758 = vsel %vm754, 1.0, 0.0
        %v759 = vpack.c.bf16 %v757, %v755
        %v760 = vpack.c.bf16 %v758, %v756
        %761 = vmatprep.subr.bf16.mxu0 %v760
        %762 = vmatpush1.bf16.msra.mxu0 %v759
        %763 = vmatprep.subr.bf16.mxu0 0
        %764 = vmatpush1.bf16.msra.mxu0 0
        %765 = vmatprep.subr.bf16.mxu0 0
        %766 = vmatpush1.bf16.msra.mxu0 0
        %767 = vmatprep.subr.bf16.mxu0 0
        %768 = vmatpush1.bf16.msra.mxu0 0
        %769 = vmatprep.subr.bf16.mxu0 0
        %770 = vmatpush1.bf16.msra.mxu0 0
        %771 = vmatprep.subr.bf16.mxu0 0
        %772 = vmatpush1.bf16.msra.mxu0 0
        %773 = vmatprep.subr.bf16.mxu0 0
        %774 = vmatpush1.bf16.msra.mxu0 0
        %775 = vmatprep.subr.bf16.mxu0 0
        %776 = vmatpush1.bf16.msra.mxu0 0
        %777 = vmatprep.subr.bf16.mxu0 0
        %778 = vmatpush1.bf16.msra.mxu0 0
        %779 = vmatprep.subr.bf16.mxu0 0
        %780 = vmatpush1.bf16.msra.mxu0 0
        %781 = vmatprep.subr.bf16.mxu0 0
        %782 = vmatpush1.bf16.msra.mxu0 0
        %783 = vmatprep.subr.bf16.mxu0 0
        %784 = vmatpush1.bf16.msra.mxu0 0
        %785 = vmatprep.subr.bf16.mxu0 0
        %786 = vmatpush1.bf16.msra.mxu0 0
        %787 = vmatprep.subr.bf16.mxu0 0
        %788 = vmatpush1.bf16.msra.mxu0 0
        %789 = vmatprep.subr.bf16.mxu0 0
        %790 = vmatpush1.bf16.msra.mxu0 0
        %791 = vmatprep.subr.bf16.mxu0 0
        %792 = vmatpush1.bf16.msra.mxu0 0
        %793 = vmatprep.mubr.bf16.mxu0 0
        %794 = vmatmul.mubr.bf16.gmra.mrb[0].mxu0 %v673
        %v795 = vpop.f32.mrb[0].mxu0
        %v796 = vadd.f32 0.0, %v795
        %v797 = vpop.f32.mrb[0].mxu0
        %v798 = vadd.f32 0.0, %v797
        %v799 = vpop.f32.mrb[0].mxu0
        %v800 = vadd.f32 0.0, %v799
        %v801 = vpop.f32.mrb[0].mxu0
        %v802 = vadd.f32 0.0, %v801
        %803 = vmatprep.mubr.bf16.mxu0 0
        %804 = vmatmul.mubr.bf16.gmra.mrb[0].mxu0 %v676
        %v805 = vpop.f32.mrb[0].mxu0
        %v806 = vadd.f32 0.0, %v805
        %v807 = vpop.f32.mrb[0].mxu0
        %v808 = vadd.f32 0.0, %v807
        %v809 = vpop.f32.mrb[0].mxu0
        %v810 = vadd.f32 0.0, %v809
        %v811 = vpop.f32.mrb[0].mxu0
        %v812 = vadd.f32 0.0, %v811
        %813 = vdwg.mxu0
        %v814 = vpack.c.bf16 %v800, %v796
        %v815 = vpack.c.bf16 %v802, %v798
        %v816 = vpack.c.bf16 %v810, %v806
        %v817 = vpack.c.bf16 %v812, %v808
        %v818 = vlaneseq
        %v819 = vshrl.u32 %v818, 7
        %v820 = vsub.s32 2, %v819
        %v821 = vrot.slane %v627, %v820
        %v822 = vlaneseq
        %v823 = vshrl.u32 %v822, 7
        %v824 = vsub.s32 6, %v823
        %v825 = vrot.slane %v627, %v824
        %v826 = vlaneseq
        %v827 = vshrl.u32 %v826, 7
        %v828 = vsub.s32 2, %v827
        %v829 = vrot.slane %v821, %v828
        %v830 = vlaneseq
        %v831 = vshrl.u32 %v830, 7
        %v832 = vsub.s32 2, %v831
        %v833 = vrot.slane %v825, %v832
        %vm834 = vcmp.eq.s32.totalorder %v633, %v829
        %vm835 = vcmp.eq.s32.totalorder %v633, %v833
        %vm836 = vcmp.eq.s32.totalorder %v634, %v829
        %vm837 = vcmp.eq.s32.totalorder %v634, %v833
        %v838 = vsel %vm834, 1.0, 0.0
        %v839 = vsel %vm835, 1.0, 0.0
        %v840 = vsel %vm836, 1.0, 0.0
        %v841 = vsel %vm837, 1.0, 0.0
        %v842 = vpack.c.bf16 %v840, %v838
        %v843 = vpack.c.bf16 %v841, %v839
        %844 = vmatprep.subr.bf16.mxu0 %v843
        %845 = vmatpush1.bf16.msra.mxu0 %v842
        %846 = vmatprep.subr.bf16.mxu0 0
        %847 = vmatpush1.bf16.msra.mxu0 0
        %848 = vmatprep.subr.bf16.mxu0 0
        %849 = vmatpush1.bf16.msra.mxu0 0
        %850 = vmatprep.subr.bf16.mxu0 0
        %851 = vmatpush1.bf16.msra.mxu0 0
        %852 = vmatprep.subr.bf16.mxu0 0
        %853 = vmatpush1.bf16.msra.mxu0 0
        %854 = vmatprep.subr.bf16.mxu0 0
        %855 = vmatpush1.bf16.msra.mxu0 0
        %856 = vmatprep.subr.bf16.mxu0 0
        %857 = vmatpush1.bf16.msra.mxu0 0
        %858 = vmatprep.subr.bf16.mxu0 0
        %859 = vmatpush1.bf16.msra.mxu0 0
        %860 = vmatprep.subr.bf16.mxu0 0
        %861 = vmatpush1.bf16.msra.mxu0 0
        %862 = vmatprep.subr.bf16.mxu0 0
        %863 = vmatpush1.bf16.msra.mxu0 0
        %864 = vmatprep.subr.bf16.mxu0 0
        %865 = vmatpush1.bf16.msra.mxu0 0
        %866 = vmatprep.subr.bf16.mxu0 0
        %867 = vmatpush1.bf16.msra.mxu0 0
        %868 = vmatprep.subr.bf16.mxu0 0
        %869 = vmatpush1.bf16.msra.mxu0 0
        %870 = vmatprep.subr.bf16.mxu0 0
        %871 = vmatpush1.bf16.msra.mxu0 0
        %872 = vmatprep.subr.bf16.mxu0 0
        %873 = vmatpush1.bf16.msra.mxu0 0
        %874 = vmatprep.subr.bf16.mxu0 0
        %875 = vmatpush1.bf16.msra.mxu0 0
        %876 = vmatprep.mubr.bf16.mxu0 0
        %877 = vmatmul.mubr.bf16.gmra.mrb[0].mxu0 %v673
        %v878 = vpop.f32.mrb[0].mxu0
        %v879 = vadd.f32 0.0, %v878
        %v880 = vpop.f32.mrb[0].mxu0
        %v881 = vadd.f32 0.0, %v880
        %v882 = vpop.f32.mrb[0].mxu0
        %v883 = vadd.f32 0.0, %v882
        %v884 = vpop.f32.mrb[0].mxu0
        %v885 = vadd.f32 0.0, %v884
        %886 = vmatprep.mubr.bf16.mxu0 0
        %887 = vmatmul.mubr.bf16.gmra.mrb[0].mxu0 %v676
        %v888 = vpop.f32.mrb[0].mxu0
        %v889 = vadd.f32 0.0, %v888
        %v890 = vpop.f32.mrb[0].mxu0
        %v891 = vadd.f32 0.0, %v890
        %v892 = vpop.f32.mrb[0].mxu0
        %v893 = vadd.f32 0.0, %v892
        %v894 = vpop.f32.mrb[0].mxu0
        %v895 = vadd.f32 0.0, %v894
        %896 = vdwg.mxu0
        %v897 = vpack.c.bf16 %v883, %v879
        %v898 = vpack.c.bf16 %v885, %v881
        %v899 = vpack.c.bf16 %v893, %v889
        %v900 = vpack.c.bf16 %v895, %v891
        %v901 = vld [vmem:[#allocation9] sm:$0xf]
        %v902 = vld [vmem:[#allocation9 + $0x4] sm:$0xf]
        %v903 = vld [vmem:[#allocation9 + $0x8] sm:$0xf]
        %v904 = vld [vmem:[#allocation9 + $0xc] sm:$0xf]
        %906 = vset.pattern.permute.xlu0 0
        %907 = vperm.xlu0 %906, %v901
        %v908 = vpop.permute.xlu0 %907
        %v911 = vunpack.c.l.s4 839922192
        %v912 = vunpack.c.0.s8 %v911
        %v913 = vlaneseq
        %v914 = vshrl.u32 %v913, 7
        %v915 = vsub.s32 %v912, %v914
        %v916 = vrot.slane %v908, %v915
        %918 = vset.pattern.permute.xlu0 0
        %919 = vperm.xlu0 %918, %v902
        %v920 = vpop.permute.xlu0 %919
        %v923 = vunpack.c.l.s4 839922192
        %v924 = vunpack.c.0.s8 %v923
        %v925 = vlaneseq
        %v926 = vshrl.u32 %v925, 7
        %v927 = vsub.s32 %v924, %v926
        %v928 = vrot.slane %v920, %v927
        %930 = vset.pattern.permute.xlu0 0
        %931 = vperm.xlu0 %930, %v903
        %v932 = vpop.permute.xlu0 %931
        %v935 = vunpack.c.l.s4 839922192
        %v936 = vunpack.c.0.s8 %v935
        %v937 = vlaneseq
        %v938 = vshrl.u32 %v937, 7
        %v939 = vsub.s32 %v936, %v938
        %v940 = vrot.slane %v932, %v939
        %942 = vset.pattern.permute.xlu0 0
        %943 = vperm.xlu0 %942, %v904
        %v944 = vpop.permute.xlu0 %943
        %v947 = vunpack.c.l.s4 839922192
        %v948 = vunpack.c.0.s8 %v947
        %v949 = vlaneseq
        %v950 = vshrl.u32 %v949, 7
        %v951 = vsub.s32 %v948, %v950
        %v952 = vrot.slane %v944, %v951
        %v957 = vunpack.c.l.b16 %v916
        %v958 = vunpack.c.l.b16 %v928
        %v959 = vunpack.c.l.b16 %v940
        %v960 = vunpack.c.l.b16 %v952
        %v961 = vpack.c.b16 %v958, %v957
        %v962 = vpack.c.b16 %v960, %v959
        %v965 = vld [vmem:[%s524] sm:$0xf]
        %v966 = vld [vmem:[%s524 + $0x4] sm:$0xf]
        %v967 = vld [vmem:[%s524 + $0x8] sm:$0xf]
        %v968 = vld [vmem:[%s524 + $0xc] sm:$0xf]
        %v969 = vld [vmem:[%s524 + $0x10] sm:$0xf]
        %v970 = vld [vmem:[%s524 + $0x14] sm:$0xf]
        %v971 = vld [vmem:[%s524 + $0x18] sm:$0xf]
        %v972 = vld [vmem:[%s524 + $0x1c] sm:$0xf]
        %v973 = vld [vmem:[%s533] sm:$0xff]
        %v974 = vld [vmem:[%s533 + $0x8] sm:$0xff]
        %v975 = vld [vmem:[%s533 + $0x10] sm:$0xff]
        %v976 = vld [vmem:[%s533 + $0x18] sm:$0xff]
        %v977 = vld [vmem:[%s533 + $0x20] sm:$0xff]
        %v978 = vld [vmem:[%s533 + $0x28] sm:$0xff]
        %v979 = vld [vmem:[%s533 + $0x30] sm:$0xff]
        %v980 = vld [vmem:[%s533 + $0x38] sm:$0xff]
        %982 = vset.pattern.permute.xlu0 0
        %983 = vperm.xlu0 %982, %v973
        %v984 = vpop.permute.xlu0 %983
        %987 = vset.pattern.permute.xlu0 0
        %988 = vperm.xlu0 %987, %v974
        %v989 = vpop.permute.xlu0 %988
        %992 = vset.pattern.permute.xlu0 0
        %993 = vperm.xlu0 %992, %v975
        %v994 = vpop.permute.xlu0 %993
        %997 = vset.pattern.permute.xlu0 0
        %998 = vperm.xlu0 %997, %v976
        %v999 = vpop.permute.xlu0 %998
        %1002 = vset.pattern.permute.xlu0 0
        %1003 = vperm.xlu0 %1002, %v977
        %v1004 = vpop.permute.xlu0 %1003
        %1007 = vset.pattern.permute.xlu0 0
        %1008 = vperm.xlu0 %1007, %v978
        %v1009 = vpop.permute.xlu0 %1008
        %1012 = vset.pattern.permute.xlu0 0
        %1013 = vperm.xlu0 %1012, %v979
        %v1014 = vpop.permute.xlu0 %1013
        %1017 = vset.pattern.permute.xlu0 0
        %1018 = vperm.xlu0 %1017, %v980
        %v1019 = vpop.permute.xlu0 %1018
        %v1029 = vunpack.c.l.b16 %v965
        %v1030 = vunpack.c.l.b16 %v966
        %v1031 = vunpack.c.l.b16 %v967
        %v1032 = vunpack.c.l.b16 %v968
        %v1033 = vunpack.c.l.b16 %v969
        %v1034 = vunpack.c.l.b16 %v970
        %v1035 = vunpack.c.l.b16 %v971
        %v1036 = vunpack.c.l.b16 %v972
        %v1037 = vpack.c.b16 %v1030, %v1029
        %v1038 = vpack.c.b16 %v1032, %v1031
        %v1039 = vpack.c.b16 %v1034, %v1033
        %v1040 = vpack.c.b16 %v1036, %v1035
        %1045 = vmatprep.subr.bf16.mxu0 %v732
        %1046 = vmatpush1.bf16.msra.mxu0 %v731
        %1047 = vmatprep.subr.bf16.mxu0 %v734
        %1048 = vmatpush1.bf16.msra.mxu0 %v733
        %1049 = vmatprep.subr.bf16.mxu0 %v815
        %1050 = vmatpush1.bf16.msra.mxu0 %v814
        %1051 = vmatprep.subr.bf16.mxu0 %v817
        %1052 = vmatpush1.bf16.msra.mxu0 %v816
        %1053 = vmatprep.subr.bf16.mxu0 %v898
        %1054 = vmatpush1.bf16.msra.mxu0 %v897
        %1055 = vmatprep.subr.bf16.mxu0 %v900
        %1056 = vmatpush1.bf16.msra.mxu0 %v899
        %1057 = vmatprep.subr.bf16.mxu0 %v961
        %1058 = vmatpush1.bf16.msra.mxu0 %v961
        %1059 = vmatprep.subr.bf16.mxu0 %v962
        %1060 = vmatpush1.bf16.msra.mxu0 %v962
        %1061 = vmatprep.subr.bf16.mxu0 0
        %1062 = vmatpush1.bf16.msra.mxu0 0
        %1063 = vmatprep.subr.bf16.mxu0 0
        %1064 = vmatpush1.bf16.msra.mxu0 0
        %1065 = vmatprep.subr.bf16.mxu0 0
        %1066 = vmatpush1.bf16.msra.mxu0 0
        %1067 = vmatprep.subr.bf16.mxu0 0
        %1068 = vmatpush1.bf16.msra.mxu0 0
        %1069 = vmatprep.subr.bf16.mxu0 0
        %1070 = vmatpush1.bf16.msra.mxu0 0
        %1071 = vmatprep.subr.bf16.mxu0 0
        %1072 = vmatpush1.bf16.msra.mxu0 0
        %1073 = vmatprep.subr.bf16.mxu0 0
        %1074 = vmatpush1.bf16.msra.mxu0 0
        %1075 = vmatprep.subr.bf16.mxu0 0
        %1076 = vmatpush1.bf16.msra.mxu0 0
        %1077 = vmatprep.mubr.bf16.mxu0 0
        %1078 = vmatmul.mubr.bf16.gmra.mrb[0].mxu0 %v1037
        %v1079 = vpop.f32.mrb[0].mxu0
        %v1080 = vadd.f32 %v984, %v1079
        %v1081 = vpop.f32.mrb[0].mxu0
        %v1082 = vadd.f32 %v984, %v1081
        %v1083 = vpop.f32.mrb[0].mxu0
        %v1084 = vadd.f32 %v989, %v1083
        %v1085 = vpop.f32.mrb[0].mxu0
        %v1086 = vadd.f32 %v989, %v1085
        %1087 = vmatprep.mubr.bf16.mxu0 0
        %1088 = vmatmul.mubr.bf16.gmra.mrb[0].mxu0 %v1038
        %v1089 = vpop.f32.mrb[0].mxu0
        %v1090 = vadd.f32 %v994, %v1089
        %v1091 = vpop.f32.mrb[0].mxu0
        %v1092 = vadd.f32 %v994, %v1091
        %v1093 = vpop.f32.mrb[0].mxu0
        %v1094 = vadd.f32 %v999, %v1093
        %v1095 = vpop.f32.mrb[0].mxu0
        %v1096 = vadd.f32 %v999, %v1095
        %1097 = vmatprep.mubr.bf16.mxu0 0
        %1098 = vmatmul.mubr.bf16.gmra.mrb[0].mxu0 %v1039
        %v1099 = vpop.f32.mrb[0].mxu0
        %v1100 = vadd.f32 %v1004, %v1099
        %v1101 = vpop.f32.mrb[0].mxu0
        %v1102 = vadd.f32 %v1004, %v1101
        %v1103 = vpop.f32.mrb[0].mxu0
        %v1104 = vadd.f32 %v1009, %v1103
        %v1105 = vpop.f32.mrb[0].mxu0
        %v1106 = vadd.f32 %v1009, %v1105
        %1107 = vmatprep.mubr.bf16.mxu0 0
        %1108 = vmatmul.mubr.bf16.gmra.mrb[0].mxu0 %v1040
        %v1109 = vpop.f32.mrb[0].mxu0
        %v1110 = vadd.f32 %v1014, %v1109
        %v1111 = vpop.f32.mrb[0].mxu0
        %v1112 = vadd.f32 %v1014, %v1111
        %v1113 = vpop.f32.mrb[0].mxu0
        %v1114 = vadd.f32 %v1019, %v1113
        %v1115 = vpop.f32.mrb[0].mxu0
        %v1116 = vadd.f32 %v1019, %v1115
        %1117 = vdwg.mxu0
        %v1118 = vmax.f32 %v1080, 0.0
        %v1119 = vmax.f32 %v1082, 0.0
        %v1120 = vmax.f32 %v1084, 0.0
        %v1121 = vmax.f32 %v1086, 0.0
        %v1122 = vmax.f32 %v1090, 0.0
        %v1123 = vmax.f32 %v1092, 0.0
        %v1124 = vmax.f32 %v1094, 0.0
        %v1125 = vmax.f32 %v1096, 0.0
        %v1126 = vmax.f32 %v1100, 0.0
        %v1127 = vmax.f32 %v1102, 0.0
        %v1128 = vmax.f32 %v1104, 0.0
        %v1129 = vmax.f32 %v1106, 0.0
        %v1130 = vmax.f32 %v1110, 0.0
        %v1131 = vmax.f32 %v1112, 0.0
        %v1132 = vmax.f32 %v1114, 0.0
        %v1133 = vmax.f32 %v1116, 0.0
        %v1134 = vld [vmem:[%s542] sm:$0xf]
        %v1135 = vld [vmem:[%s542 + $0x4] sm:$0xf]
        %v1136 = vld [vmem:[%s542 + $0x8] sm:$0xf]
        %v1137 = vld [vmem:[%s542 + $0xc] sm:$0xf]
        %v1138 = vpack.c.bf16 %v1120, %v1118
        %v1139 = vpack.c.bf16 %v1121, %v1119
        %v1140 = vpack.c.bf16 %v1124, %v1122
        %v1141 = vpack.c.bf16 %v1125, %v1123
        %v1142 = vpack.c.bf16 %v1128, %v1126
        %v1143 = vpack.c.bf16 %v1129, %v1127
        %v1144 = vpack.c.bf16 %v1132, %v1130
        %v1145 = vpack.c.bf16 %v1133, %v1131
        %v1146 = vld [vmem:[%s551] sm:$0xff]
        %v1147 = vld [vmem:[%s551 + $0x8] sm:$0xff]
        %v1148 = vld [vmem:[%s551 + $0x10] sm:$0xff]
        %v1149 = vld [vmem:[%s551 + $0x18] sm:$0xff]
        %1151 = vset.pattern.permute.xlu0 0
        %1152 = vperm.xlu0 %1151, %v1146
        %v1153 = vpop.permute.xlu0 %1152
        %1156 = vset.pattern.permute.xlu0 0
        %1157 = vperm.xlu0 %1156, %v1147
        %v1158 = vpop.permute.xlu0 %1157
        %1161 = vset.pattern.permute.xlu0 0
        %1162 = vperm.xlu0 %1161, %v1148
        %v1163 = vpop.permute.xlu0 %1162
        %1166 = vset.pattern.permute.xlu0 0
        %1167 = vperm.xlu0 %1166, %v1149
        %v1168 = vpop.permute.xlu0 %1167
        %v1174 = vunpack.c.l.b16 %v1134
        %v1175 = vunpack.c.l.b16 %v1135
        %v1176 = vunpack.c.l.b16 %v1136
        %v1177 = vunpack.c.l.b16 %v1137
        %v1178 = vpack.c.b16 %v1175, %v1174
        %v1179 = vpack.c.b16 %v1177, %v1176
        %vm1180 = vcmask 523264
        %v1182 = vsel %vm1180, %v1178, 0
        %v1185 = vsel %vm1180, %v1179, 0
        %1187 = vmatprep.subr.bf16.mxu0 %v1139
        %1188 = vmatpush1.bf16.msra.mxu0 %v1138
        %1189 = vmatprep.subr.bf16.mxu0 %v1141
        %1190 = vmatpush1.bf16.msra.mxu0 %v1140
        %1191 = vmatprep.subr.bf16.mxu0 %v1143
        %1192 = vmatpush1.bf16.msra.mxu0 %v1142
        %1193 = vmatprep.subr.bf16.mxu0 %v1145
        %1194 = vmatpush1.bf16.msra.mxu0 %v1144
        %1195 = vmatprep.subr.bf16.mxu0 0
        %1196 = vmatpush1.bf16.msra.mxu0 0
        %1197 = vmatprep.subr.bf16.mxu0 0
        %1198 = vmatpush1.bf16.msra.mxu0 0
        %1199 = vmatprep.subr.bf16.mxu0 0
        %1200 = vmatpush1.bf16.msra.mxu0 0
        %1201 = vmatprep.subr.bf16.mxu0 0
        %1202 = vmatpush1.bf16.msra.mxu0 0
        %1203 = vmatprep.subr.bf16.mxu0 0
        %1204 = vmatpush1.bf16.msra.mxu0 0
        %1205 = vmatprep.subr.bf16.mxu0 0
        %1206 = vmatpush1.bf16.msra.mxu0 0
        %1207 = vmatprep.subr.bf16.mxu0 0
        %1208 = vmatpush1.bf16.msra.mxu0 0
        %1209 = vmatprep.subr.bf16.mxu0 0
        %1210 = vmatpush1.bf16.msra.mxu0 0
        %1211 = vmatprep.subr.bf16.mxu0 0
        %1212 = vmatpush1.bf16.msra.mxu0 0
        %1213 = vmatprep.subr.bf16.mxu0 0
        %1214 = vmatpush1.bf16.msra.mxu0 0
        %1215 = vmatprep.subr.bf16.mxu0 0
        %1216 = vmatpush1.bf16.msra.mxu0 0
        %1217 = vmatprep.subr.bf16.mxu0 0
        %1218 = vmatpush1.bf16.msra.mxu0 0
        %1219 = vmatprep.mubr.bf16.mxu0 0
        %1220 = vmatmul.mubr.bf16.gmra.mrb[0].mxu0 %v1182
        %v1221 = vpop.f32.mrb[0].mxu0
        %v1222 = vadd.f32 %v1153, %v1221
        %v1223 = vpop.f32.mrb[0].mxu0
        %v1224 = vadd.f32 %v1153, %v1223
        %v1225 = vpop.f32.mrb[0].mxu0
        %v1226 = vadd.f32 %v1158, %v1225
        %v1227 = vpop.f32.mrb[0].mxu0
        %v1228 = vadd.f32 %v1158, %v1227
        %1229 = vmatprep.mubr.bf16.mxu0 0
        %1230 = vmatmul.mubr.bf16.gmra.mrb[0].mxu0 %v1185
        %v1231 = vpop.f32.mrb[0].mxu0
        %v1232 = vadd.f32 %v1163, %v1231
        %v1233 = vpop.f32.mrb[0].mxu0
        %v1234 = vadd.f32 %v1163, %v1233
        %v1235 = vpop.f32.mrb[0].mxu0
        %v1236 = vadd.f32 %v1168, %v1235
        %v1237 = vpop.f32.mrb[0].mxu0
        %v1238 = vadd.f32 %v1168, %v1237
        %1239 = vdwg.mxu0
        %v1240 = vmax.f32 %v1222, 0.0
        %v1241 = vmax.f32 %v1224, 0.0
        %v1242 = vmax.f32 %v1226, 0.0
        %v1243 = vmax.f32 %v1228, 0.0
        %v1244 = vmax.f32 %v1232, 0.0
        %v1245 = vmax.f32 %v1234, 0.0
        %v1246 = vmax.f32 %v1236, 0.0
        %v1247 = vmax.f32 %v1238, 0.0
        %v1248 = vld [vmem:[#allocation16] sm:$0xf]
        %v1249 = vld [vmem:[#allocation16 + $0x4] sm:$0xf]
        %v1250 = vld [vmem:[#allocation16 + $0x8] sm:$0xf]
        %v1251 = vld [vmem:[#allocation16 + $0xc] sm:$0xf]
        %v1252 = vpack.c.bf16 %v1242, %v1240
        %v1253 = vpack.c.bf16 %v1243, %v1241
        %v1254 = vpack.c.bf16 %v1246, %v1244
        %v1255 = vpack.c.bf16 %v1247, %v1245
        %v1256 = vld [vmem:[#allocation18] sm:$0xff]
        %v1257 = vld [vmem:[#allocation18 + $0x8] sm:$0xff]
        %v1258 = vld [vmem:[#allocation18 + $0x10] sm:$0xff]
        %v1259 = vld [vmem:[#allocation18 + $0x18] sm:$0xff]
        %1261 = vset.pattern.permute.xlu0 0
        %1262 = vperm.xlu0 %1261, %v1256
        %v1263 = vpop.permute.xlu0 %1262
        %1266 = vset.pattern.permute.xlu0 0
        %1267 = vperm.xlu0 %1266, %v1257
        %v1268 = vpop.permute.xlu0 %1267
        %1271 = vset.pattern.permute.xlu0 0
        %1272 = vperm.xlu0 %1271, %v1258
        %v1273 = vpop.permute.xlu0 %1272
        %1276 = vset.pattern.permute.xlu0 0
        %1277 = vperm.xlu0 %1276, %v1259
        %v1278 = vpop.permute.xlu0 %1277
        %v1284 = vunpack.c.l.b16 %v1248
        %v1285 = vunpack.c.l.b16 %v1249
        %v1286 = vunpack.c.l.b16 %v1250
        %v1287 = vunpack.c.l.b16 %v1251
        %v1288 = vpack.c.b16 %v1285, %v1284
        %v1289 = vpack.c.b16 %v1287, %v1286
        %vm1290 = vcmask 261120
        %v1292 = vsel %vm1290, %v1288, 0
        %v1295 = vsel %vm1290, %v1289, 0
        %1297 = vmatprep.subr.bf16.mxu0 %v1253
        %1298 = vmatpush1.bf16.msra.mxu0 %v1252
        %1299 = vmatprep.subr.bf16.mxu0 %v1255
        %1300 = vmatpush1.bf16.msra.mxu0 %v1254
        %1301 = vmatprep.subr.bf16.mxu0 0
        %1302 = vmatpush1.bf16.msra.mxu0 0
        %1303 = vmatprep.subr.bf16.mxu0 0
        %1304 = vmatpush1.bf16.msra.mxu0 0
        %1305 = vmatprep.subr.bf16.mxu0 0
        %1306 = vmatpush1.bf16.msra.mxu0 0
        %1307 = vmatprep.subr.bf16.mxu0 0
        %1308 = vmatpush1.bf16.msra.mxu0 0
        %1309 = vmatprep.subr.bf16.mxu0 0
        %1310 = vmatpush1.bf16.msra.mxu0 0
        %1311 = vmatprep.subr.bf16.mxu0 0
        %1312 = vmatpush1.bf16.msra.mxu0 0
        %1313 = vmatprep.subr.bf16.mxu0 0
        %1314 = vmatpush1.bf16.msra.mxu0 0
        %1315 = vmatprep.subr.bf16.mxu0 0
        %1316 = vmatpush1.bf16.msra.mxu0 0
        %1317 = vmatprep.subr.bf16.mxu0 0
        %1318 = vmatpush1.bf16.msra.mxu0 0
        %1319 = vmatprep.subr.bf16.mxu0 0
        %1320 = vmatpush1.bf16.msra.mxu0 0
        %1321 = vmatprep.subr.bf16.mxu0 0
        %1322 = vmatpush1.bf16.msra.mxu0 0
        %1323 = vmatprep.subr.bf16.mxu0 0
        %1324 = vmatpush1.bf16.msra.mxu0 0
        %1325 = vmatprep.subr.bf16.mxu0 0
        %1326 = vmatpush1.bf16.msra.mxu0 0
        %1327 = vmatprep.subr.bf16.mxu0 0
        %1328 = vmatpush1.bf16.msra.mxu0 0
        %1329 = vmatprep.mubr.bf16.mxu0 0
        %1330 = vmatmul.mubr.bf16.gmra.mrb[0].mxu0 %v1292
        %v1331 = vpop.f32.mrb[0].mxu0
        %v1332 = vadd.f32 %v1263, %v1331
        %v1333 = vpop.f32.mrb[0].mxu0
        %v1334 = vadd.f32 %v1263, %v1333
        %v1335 = vpop.f32.mrb[0].mxu0
        %v1336 = vadd.f32 %v1268, %v1335
        %v1337 = vpop.f32.mrb[0].mxu0
        %v1338 = vadd.f32 %v1268, %v1337
        %1339 = vmatprep.mubr.bf16.mxu0 0
        %1340 = vmatmul.mubr.bf16.gmra.mrb[0].mxu0 %v1295
        %v1341 = vpop.f32.mrb[0].mxu0
        %v1342 = vadd.f32 %v1273, %v1341
        %v1343 = vpop.f32.mrb[0].mxu0
        %v1344 = vadd.f32 %v1273, %v1343
        %v1345 = vpop.f32.mrb[0].mxu0
        %v1346 = vadd.f32 %v1278, %v1345
        %v1347 = vpop.f32.mrb[0].mxu0
        %v1348 = vadd.f32 %v1278, %v1347
        %1349 = vdwg.mxu0
        %v1350 = vmax.f32 %v1332, 0.0
        %v1351 = vmax.f32 %v1334, 0.0
        %v1352 = vmax.f32 %v1336, 0.0
        %v1353 = vmax.f32 %v1338, 0.0
        %v1354 = vmax.f32 %v1342, 0.0
        %v1355 = vmax.f32 %v1344, 0.0
        %v1356 = vmax.f32 %v1346, 0.0
        %v1357 = vmax.f32 %v1348, 0.0
        %v1358 = vld [vmem:[#allocation19] sm:$0xff]
        %v1359 = vld [vmem:[#allocation19 + $0x8] sm:$0xff]
        %v1360 = vld [vmem:[#allocation19 + $0x10] sm:$0xff]
        %v1361 = vld [vmem:[#allocation19 + $0x18] sm:$0xff]
        %1363 = vset.pattern.permute.xlu0 0
        %1364 = vperm.xlu0 %1363, %v1358
        %v1365 = vpop.permute.xlu0 %1364
        %1368 = vset.pattern.permute.xlu0 0
        %1369 = vperm.xlu0 %1368, %v1359
        %v1370 = vpop.permute.xlu0 %1369
        %1373 = vset.pattern.permute.xlu0 0
        %1374 = vperm.xlu0 %1373, %v1360
        %v1375 = vpop.permute.xlu0 %1374
        %1378 = vset.pattern.permute.xlu0 0
        %1379 = vperm.xlu0 %1378, %v1361
        %v1380 = vpop.permute.xlu0 %1379
        %v1382 = vmul.f32 %v1350, %v1365
        %v1383 = vmul.f32 %v1351, %v1365
        %v1384 = vmul.f32 %v1352, %v1370
        %v1385 = vmul.f32 %v1353, %v1370
        %v1386 = vmul.f32 %v1354, %v1375
        %v1387 = vmul.f32 %v1355, %v1375
        %v1388 = vmul.f32 %v1356, %v1380
        %v1389 = vmul.f32 %v1357, %v1380
        %v1390 = vadd.f32 %v1382, %v1384
        %v1391 = vadd.f32 %v1390, %v1386
        %v1392 = vadd.f32 %v1391, %v1388
        %v1393 = vrot.slane %v1392, 4
        %v1394 = vadd.f32 %v1392, %v1393
        %v1395 = vrot.slane %v1394, 2
        %v1396 = vadd.f32 %v1394, %v1395
        %v1397 = vrot.slane %v1396, 1
        %v1398 = vadd.f32 %v1396, %v1397
        %v1399 = vadd.f32 %v1383, %v1385
        %v1400 = vadd.f32 %v1399, %v1387
        %v1401 = vadd.f32 %v1400, %v1389
        %v1402 = vrot.slane %v1401, 4
        %v1403 = vadd.f32 %v1401, %v1402
        %v1404 = vrot.slane %v1403, 2
        %v1405 = vadd.f32 %v1403, %v1404
        %v1406 = vrot.slane %v1405, 1
        %v1407 = vadd.f32 %v1405, %v1406
        %v1410 = vcombine.low %v1398, %v1407
        %v1412 = vunpack.c.l.s4 1966171168
        %v1413 = vunpack.c.0.s8 %v1412
        %v1414 = vlaneseq
        %v1415 = vshrl.u32 %v1414, 7
        %v1416 = vsub.s32 %v1413, %v1415
        %v1417 = vrot.slane %v1410, %v1416
        %v1419 = vunpack.c.l.s4 1966171168
        %v1420 = vunpack.c.0.s8 %v1419
        %v1421 = vlaneseq
        %v1422 = vshrl.u32 %v1421, 7
        %v1423 = vsub.s32 %v1420, %v1422
        %v1424 = vrot.slane %v1417, %v1423
        %v1426 = vlaneseq
        %vm1427 = vcmp.ge.s32.totalorder %v1426, 0
        %vm1428 = vcmp.lt.s32.totalorder %v1426, 256
        %vm1429 = vmand %vm1427, %vm1428
        %1430 = vst.msk [vmem:[%s619] sm:$0x3] %vm1429, %v1424
        %s1431 = sand.u32 %s292, 1
        %s1432 = scalar_lea.sflag [#allocation6], %s1431
        %s1433 = sand.u32 %s292, 1
        %s1434 = smul.addr %s1433, 2
        %s1435 = scalar_lea.vmem [#allocation21], %s1434
        // Predicated region
        $region101: #{clause_decoder_forward.1} parent=59 // pred_check
          %p1436 = pneg %p302
        $region102: #{clause_decoder_forward.1} parent=59 // pred_check_branch
          %1438 = sbr.rel (%p1436) target = $region104
        $region103: #{clause_decoder_forward.1} parent=59 // pred_region
          %s1439 = smul.u32 2, %s41
          %s1441 = ssub.s32 32, 32
          %1442 = vsyncadd %s1432, %s1441
          %s1443 = smul.addr %s1439, 16
          %s1444 = scalar_lea.hbm %s11, %s1443
          %s1446 = sshll.u32 %s1435, 4
          %s1447 = int_to_ptr.vmem [resolvable:$true] %s1446
          %1449 = dma.vmem_to_hbm [thread:$0]  %s1447, 32, %s1444, %s1432
        $region104: #{clause_decoder_forward.1} parent=59 // pred_fallthru
          _
      $region60: #{clause_decoder_forward.1} parent=5 // pred_fallthru
        _
      %p1450 = scmp.le.s32.totalorder 2, %s36
      // Predicated region
      $region105: #{clause_decoder_forward.1} parent=5 // pred_check
        %p1451 = pneg %p1450
      $region106: #{clause_decoder_forward.1} parent=5 // pred_check_branch
        %1453 = sbr.rel (%p1451) target = $region108
      $region107: #{clause_decoder_forward.1} parent=5 // pred_region
        %s1454 = ssub.s32 %s36, 2
        // Predicated region
        $region109: #{clause_decoder_forward.1} parent=107 // pred_check
          %p1455 = pneg %p308
        $region110: #{clause_decoder_forward.1} parent=107 // pred_check_branch
          %1457 = sbr.rel (%p1455) target = $region112
        $region111: #{clause_decoder_forward.1} parent=107 // pred_region
          %s1458 = sand.u32 %s293, 1
          %s1459 = scalar_lea.sflag [#allocation6], %s1458
          %s1460 = sand.u32 %s293, 1
          %s1461 = smul.addr %s1460, 2
          %s1462 = scalar_lea.vmem [#allocation21], %s1461
          %1463 = dma.done %s1459, 32
        $region112: #{clause_decoder_forward.1} parent=107 // pred_fallthru
          _
      $region108: #{clause_decoder_forward.1} parent=5 // pred_fallthru
        _
    $region6: #{clause_decoder_forward.1} parent=1 // loop_footer
      %s40 = sadd.s32 1, %s36
    $region7: #{clause_decoder_forward.1} parent=1 // loop_footer_branch
      %35 = sbr.rel target = $region3
    $region8: #{clause_decoder_forward.1} parent=1 // loop_exit
      _
    %1464 = vsyncpa [#allocation5], 1
    %s1465 = scalar_lea.sflag [#allocation5], 1
    %1466 = vsyncpa %s1465, 1
    %1467 = vsyncpa [#allocation8], 1
    %1468 = vsyncpa [#allocation11], 1
    %s1469 = scalar_lea.sflag [#allocation11], 1
    %1470 = vsyncpa %s1469, 1
    %1471 = vsyncpa [#allocation14], 1
    %s1472 = scalar_lea.sflag [#allocation14], 1
    %1473 = vsyncpa %s1472, 1
    %1474 = vsyncpa [#allocation17], 1
    %1475 = vsyncpa [#allocation20], 1
    %1476 = vsyncpa [#allocation6], 1
    %s1477 = scalar_lea.sflag [#allocation6], 1
    %1478 = vsyncpa %s1477, 1

</llo_original>
